<compile_context>
chip_gen: v5e
topology: v5e:2x2
jax: 0.10.0
libtpu: 0.0.40
codegen_flags: <defaults>
</compile_context>

<pallas_src>
import functools

import jax
import jax.numpy as jnp
import numpy as np
from jax.experimental import pallas as pl
from jax.experimental.pallas import tpu as pltpu


def _round_up(x: int, m: int) -> int:
    return ((x + m - 1) // m) * m


# ----------------------------------------------------------------------------
# Pallas kernel 1: transposed GEMM + bias (+ReLU).
#   out[N, Mt] = W[N, K] @ P[K, Mt] + b[N, 1]
# W and b use constant index maps (fetched once, resident); P / out are tiled
# over the long M axis and auto double-buffered by Pallas.
# ----------------------------------------------------------------------------
def _matmul_t_kernel(w_ref, p_ref, b_ref, o_ref, *, apply_relu: bool):
    acc = jnp.dot(w_ref[...], p_ref[...], preferred_element_type=jnp.float32)
    acc = acc + b_ref[...]                       # (N, 1) broadcast over lanes
    if apply_relu:
        acc = jnp.maximum(acc, 0.0)
    o_ref[...] = acc.astype(o_ref.dtype)


def matmul_t(w, p, b, *, relu: bool, out_dtype=jnp.bfloat16, max_mt: int = 1024):
    """w: (N, K) bf16, p: (K, M) bf16, b: (N, 1) f32 -> (N, M) out_dtype."""
    N, K = w.shape
    K2, M = p.shape
    assert K == K2
    m128 = _round_up(M, 128)
    mt = min(max_mt, m128)                 # lane-dense tiles, VMEM-safe on v7x
    m_pad = _round_up(m128, mt)
    if m_pad != M:
        p = jnp.pad(p, ((0, 0), (0, m_pad - M)))
    grid = (m_pad // mt,)
    cost = pl.CostEstimate(
        flops=2 * N * K * m_pad,
        transcendentals=0,
        bytes_accessed=(N * K + K * m_pad) * 2
        + N * m_pad * jnp.dtype(out_dtype).itemsize
        + N * 4,
    )
    out = pl.pallas_call(
        functools.partial(_matmul_t_kernel, apply_relu=relu),
        out_shape=jax.ShapeDtypeStruct((N, m_pad), out_dtype),
        grid=grid,
        in_specs=[
            pl.BlockSpec((N, K), lambda m: (0, 0)),    # weights, resident
            pl.BlockSpec((K, mt), lambda m: (0, m)),   # patch tile (pipelined)
            pl.BlockSpec((N, 1), lambda m: (0, 0)),    # bias, resident
        ],
        out_specs=pl.BlockSpec((N, mt), lambda m: (0, m)),
        compiler_params=pltpu.CompilerParams(
            dimension_semantics=("parallel",),
            vmem_limit_bytes=32 * 1024 * 1024,
        ),
        cost_estimate=cost,
    )(w, p, b)
    return out[:, :M] if m_pad != M else out


# ----------------------------------------------------------------------------
# Pallas kernel 2: fused FC head, computed in transposed orientation.
#   logits^T = W2^T @ relu(W1^T @ x^T + b1) + b2
# ----------------------------------------------------------------------------
def _fc_head_kernel(x_ref, w1_ref, b1_ref, w2_ref, b2_ref, o_ref):
    h = jnp.dot(w1_ref[...], x_ref[...], preferred_element_type=jnp.float32)
    h = jnp.maximum(h + b1_ref[...], 0.0).astype(jnp.bfloat16)
    y = jnp.dot(w2_ref[...], h, preferred_element_type=jnp.float32)
    o_ref[...] = (y + b2_ref[...]).astype(o_ref.dtype)


def fc_head(x_t, w1t, b1, w2t, b2):
    """x_t: (feat, B) bf16 -> logits^T (n_out, B) f32 (fc1+ReLU+fc2 fused)."""
    feat, B = x_t.shape
    n_hid, feat2 = w1t.shape
    n_out = w2t.shape[0]
    assert feat == feat2
    b128 = _round_up(B, 128)
    bt = min(512, b128)
    b_pad = _round_up(b128, bt)
    if b_pad != B:
        x_t = jnp.pad(x_t, ((0, 0), (0, b_pad - B)))
    grid = (b_pad // bt,)
    cost = pl.CostEstimate(
        flops=2 * b_pad * feat * n_hid + 2 * b_pad * n_hid * n_out,
        transcendentals=0,
        bytes_accessed=(feat * b_pad + n_hid * feat + n_out * n_hid) * 2
        + n_out * b_pad * 4 + (n_hid + n_out) * 4,
    )
    out = pl.pallas_call(
        _fc_head_kernel,
        out_shape=jax.ShapeDtypeStruct((n_out, b_pad), jnp.float32),
        grid=grid,
        in_specs=[
            pl.BlockSpec((feat, bt), lambda m: (0, m)),     # activations
            pl.BlockSpec((n_hid, feat), lambda m: (0, 0)),  # fc1 weights
            pl.BlockSpec((n_hid, 1), lambda m: (0, 0)),     # fc1 bias
            pl.BlockSpec((n_out, n_hid), lambda m: (0, 0)),  # fc2 weights
            pl.BlockSpec((n_out, 1), lambda m: (0, 0)),     # fc2 bias
        ],
        out_specs=pl.BlockSpec((n_out, bt), lambda m: (0, m)),
        compiler_params=pltpu.CompilerParams(
            dimension_semantics=("parallel",),
            vmem_limit_bytes=32 * 1024 * 1024,
        ),
        cost_estimate=cost,
    )(x_t, w1t, b1, w2t, b2)
    return out[:, :B] if b_pad != B else out


# ----------------------------------------------------------------------------
# im2col glue in channel-major (C, H, W, B) layout.
# Patch rows are ordered (c, kh, kw) to match PyTorch's (Cout, Cin, KH, KW)
# weight reshaped to (Cout, Cin*KH*KW).
# ----------------------------------------------------------------------------
def im2col_chwb(x, kh, kw, sh, sw):
    C, H, W, B = x.shape
    OH = (H - kh) // sh + 1
    OW = (W - kw) // sw + 1
    cols = []
    for i in range(kh):
        for j in range(kw):
            cols.append(x[:, i:i + sh * OH:sh, j:j + sw * OW:sw, :])
    p = jnp.stack(cols, axis=1)                  # (C, kh*kw, OH, OW, B)
    return p.reshape(C * kh * kw, OH * OW * B), (OH, OW)


def conv2d_relu_t(x_chwb, w_mat, b_col, *, k, stride):
    """Channel-major conv + ReLU: (Cin,H,W,B) bf16 -> (Cout,OH,OW,B) bf16."""
    _, _, _, B = x_chwb.shape
    patches, (OH, OW) = im2col_chwb(x_chwb, k, k, stride, stride)
    cout = w_mat.shape[0]
    out = matmul_t(w_mat, patches, b_col, relu=True, out_dtype=jnp.bfloat16)
    return out.reshape(cout, OH, OW, B)


# ----------------------------------------------------------------------------
# Actor parameters / forward
# ----------------------------------------------------------------------------
def conv_out_hw(h, w):
    h = (h - 8) // 4 + 1; w = (w - 8) // 4 + 1   # conv1
    h = (h - 4) // 2 + 1; w = (w - 4) // 2 + 1   # conv2
    h = (h - 3) // 1 + 1; w = (w - 3) // 1 + 1   # conv3
    return h, w


def init_actor_params(key, state_dim, action_dim):
    """Deterministic synthetic init (shapes match the PyTorch module)."""
    c_in, H, W = state_dim
    oh, ow = conv_out_hw(H, W)
    feat = 64 * oh * ow                           # == Actor.feature_size()
    ks = jax.random.split(key, 8)
    s = 0.05
    return {
        "w1": s * jax.random.normal(ks[0], (32, c_in, 8, 8), jnp.float32),
        "b1": s * jax.random.normal(ks[1], (32,), jnp.float32),
        "w2": s * jax.random.normal(ks[2], (64, 32, 4, 4), jnp.float32),
        "b2": s * jax.random.normal(ks[3], (64,), jnp.float32),
        "w3": s * jax.random.normal(ks[4], (64, 64, 3, 3), jnp.float32),
        "b3": s * jax.random.normal(ks[5], (64,), jnp.float32),
        # fc weights stored as (in, out); orthogonal init replaced by scaled normal
        "fc1_w": s * jax.random.normal(ks[6], (feat, 512), jnp.float32),
        "fc1_b": jnp.zeros((512,), jnp.float32),
        "fc2_w": 0.01 * s * jax.random.normal(ks[7], (512, action_dim), jnp.float32),
        "fc2_b": jnp.zeros((action_dim,), jnp.float32),
    }


def prepare_actor_params(p):
    """One-time prep: conv weights -> bf16 (Cout, Cin*KH*KW); fc weights
    pre-transposed bf16; biases -> f32 column vectors."""
    def conv(w, b):
        cout = w.shape[0]
        return (w.reshape(cout, -1).astype(jnp.bfloat16),
                b.reshape(cout, 1).astype(jnp.float32))
    c1w, c1b = conv(p["w1"], p["b1"])
    c2w, c2b = conv(p["w2"], p["b2"])
    c3w, c3b = conv(p["w3"], p["b3"])
    return {
        "c1_w": c1w, "c1_b": c1b,
        "c2_w": c2w, "c2_b": c2b,
        "c3_w": c3w, "c3_b": c3b,
        "fc1_wt": p["fc1_w"].T.astype(jnp.bfloat16),            # (512, feat)
        "fc1_b": p["fc1_b"].reshape(-1, 1).astype(jnp.float32),
        "fc2_wt": p["fc2_w"].T.astype(jnp.bfloat16),            # (A, 512)
        "fc2_b": p["fc2_b"].reshape(-1, 1).astype(jnp.float32),
    }


def actor_forward(params, x_nchw):
    """x_nchw: (B, C, H, W) f32 -> logits (B, action_dim) f32."""
    x = jnp.transpose(x_nchw, (1, 2, 3, 0)).astype(jnp.bfloat16)  # (C,H,W,B)
    x = conv2d_relu_t(x, params["c1_w"], params["c1_b"], k=8, stride=4)
    x = conv2d_relu_t(x, params["c2_w"], params["c2_b"], k=4, stride=2)
    x = conv2d_relu_t(x, params["c3_w"], params["c3_b"], k=3, stride=1)
    C, OH, OW, B = x.shape
    # Pure reshape: row order (c, h, w) == PyTorch x.view(B, -1) order.
    x_t = x.reshape(C * OH * OW, B)
    logits_t = fc_head(x_t, params["fc1_wt"], params["fc1_b"],
                       params["fc2_wt"], params["fc2_b"])
    return logits_t.T


# ----------------------------------------------------------------------------
# Independent reference (XLA convs) using the same bf16/f32 mixed precision.
# ----------------------------------------------------------------------------
def actor_forward_ref(p, x_nchw):
    def conv(x, w, b, stride):
        y = jax.lax.conv_general_dilated(
            x.astype(jnp.bfloat16), w.astype(jnp.bfloat16),
            window_strides=(stride, stride), padding="VALID",
            dimension_numbers=("NCHW", "OIHW", "NCHW"),
            preferred_element_type=jnp.float32)
        y = y + b.reshape(1, -1, 1, 1)
        return jnp.maximum(y, 0.0).astype(jnp.bfloat16)

    x = conv(x_nchw, p["w1"], p["b1"], 4)
    x = conv(x, p["w2"], p["b2"], 2)
    x = conv(x, p["w3"], p["b3"], 1)
    B = x.shape[0]
    xf = x.reshape(B, -1)
    h = jnp.dot(xf, p["fc1_w"].astype(jnp.bfloat16),
                preferred_element_type=jnp.float32) + p["fc1_b"][None, :]
    h = jnp.maximum(h, 0.0).astype(jnp.bfloat16)
    return jnp.dot(h, p["fc2_w"].astype(jnp.bfloat16),
                   preferred_element_type=jnp.float32) + p["fc2_b"][None, :]


if __name__ == "__main__":
    # Small Atari-like shapes: state_dim=(4, 36, 36) -> conv stack collapses
    # spatial 36 -> 8 -> 3 -> 1, feature_size = 64; action_dim=6; batch=2.
    state_dim = (4, 36, 36)
    action_dim = 6
    batch = 2

    key = jax.random.PRNGKey(0)
    k_param, k_x = jax.random.split(key)
    raw = init_actor_params(k_param, state_dim, action_dim)
    params = prepare_actor_params(raw)
    x = jax.random.normal(k_x, (batch, *state_dim), jnp.float32)

    logits = jax.block_until_ready(jax.jit(actor_forward)(params, x))
    ref = jax.block_until_ready(actor_forward_ref(raw, x))

    assert logits.shape == (batch, action_dim)
    np.testing.assert_allclose(np.asarray(logits), np.asarray(ref),
                               rtol=2e-2, atol=2e-4)

    print("KERNEL_OK")
</pallas_src>

<mosaic_0001>
module attributes {stable_mosaic.version = 11 : i64} {
  func.func @_matmul_t_kernel(%arg0: i32, %arg1: memref<32x256xbf16, #tpu.memory_space<vmem>>, %arg2: memref<256x128xbf16, #tpu.memory_space<vmem>>, %arg3: memref<32x1xf32, #tpu.memory_space<vmem>>, %arg4: memref<32x128xbf16, #tpu.memory_space<vmem>>) attributes {dimension_semantics = [#tpu.dimension_semantics<parallel>], iteration_bounds = array<i64: 1>, scalar_prefetch = 0 : i64, scratch_operands = 0 : i64, tpu.core_type = #tpu.core_type<tc>, window_params = [{pipeline_mode = #tpu.pipeline_mode<synchronous>, transform_indices = @transform_0, window_bounds = array<i64: 32, 256>}, {transform_indices = @transform_1, window_bounds = array<i64: 256, 128>}, {pipeline_mode = #tpu.pipeline_mode<synchronous>, transform_indices = @transform_2, window_bounds = array<i64: 32, 1>}, {transform_indices = @transform_3, window_bounds = array<i64: 32, 128>}]} {
    %c0 = arith.constant 0 : index
    %c0_0 = arith.constant 0 : index
    %0 = vector.load %arg1[%c0, %c0_0] : memref<32x256xbf16, #tpu.memory_space<vmem>>, vector<32x256xbf16>
    %c0_1 = arith.constant 0 : index
    %c0_2 = arith.constant 0 : index
    %1 = vector.load %arg2[%c0_1, %c0_2] : memref<256x128xbf16, #tpu.memory_space<vmem>>, vector<256x128xbf16>
    %cst = arith.constant dense<0.000000e+00> : vector<32x128xf32>
    %2 = tpu.matmul %0, %1, %cst {dimension_numbers = #tpu.dot_dimension_numbers<[1], [0], [0], [1], [0, 0, 1, 1], [], []>} : vector<32x256xbf16>, vector<256x128xbf16>, vector<32x128xf32> -> vector<32x128xf32>
    %c0_3 = arith.constant 0 : index
    %c0_4 = arith.constant 0 : index
    %3 = vector.load %arg3[%c0_3, %c0_4] : memref<32x1xf32, #tpu.memory_space<vmem>>, vector<32x1xf32>
    %4 = vector.broadcast %3 : vector<32x1xf32> to vector<32x128xf32>
    %5 = arith.addf %2, %4 : vector<32x128xf32>
    %cst_5 = arith.constant 0.000000e+00 : f32
    %6 = vector.broadcast %cst_5 : f32 to vector<32x128xf32>
    %7 = arith.maximumf %5, %6 : vector<32x128xf32>
    %8 = arith.truncf %7 : vector<32x128xf32> to vector<32x128xbf16>
    %c0_6 = arith.constant 0 : index
    %c0_7 = arith.constant 0 : index
    %9 = vector.load %arg4[%c0_6, %c0_7] : memref<32x128xbf16, #tpu.memory_space<vmem>>, vector<32x128xbf16>
    tpu.vector_store %arg4[%c0_6, %c0_7], %8 {strides = array<i32>} : memref<32x128xbf16, #tpu.memory_space<vmem>>, vector<32x128xbf16>,
    return
  }
  func.func @transform_0(%arg0: i32) -> (i32, i32) {
    %c0_i32 = arith.constant 0 : i32
    %c0_i32_0 = arith.constant 0 : i32
    %c0_i32_1 = arith.constant 0 : i32
    return %c0_i32, %c0_i32_0 : i32, i32
  }
  func.func @transform_1(%arg0: i32) -> (i32, i32) {
    %c0_i32 = arith.constant 0 : i32
    %c0_i32_0 = arith.constant 0 : i32
    return %c0_i32, %arg0 : i32, i32
  }
  func.func @transform_2(%arg0: i32) -> (i32, i32) {
    %c0_i32 = arith.constant 0 : i32
    %c0_i32_0 = arith.constant 0 : i32
    %c0_i32_1 = arith.constant 0 : i32
    return %c0_i32, %c0_i32_0 : i32, i32
  }
  func.func @transform_3(%arg0: i32) -> (i32, i32) {
    %c0_i32 = arith.constant 0 : i32
    %c0_i32_0 = arith.constant 0 : i32
    return %c0_i32, %arg0 : i32, i32
  }
}

module attributes {stable_mosaic.version = 11 : i64} {
  func.func @_matmul_t_kernel(%arg0: i32, %arg1: memref<64x512xbf16, #tpu.memory_space<vmem>>, %arg2: memref<512x128xbf16, #tpu.memory_space<vmem>>, %arg3: memref<64x1xf32, #tpu.memory_space<vmem>>, %arg4: memref<64x128xbf16, #tpu.memory_space<vmem>>) attributes {dimension_semantics = [#tpu.dimension_semantics<parallel>], iteration_bounds = array<i64: 1>, scalar_prefetch = 0 : i64, scratch_operands = 0 : i64, tpu.core_type = #tpu.core_type<tc>, window_params = [{pipeline_mode = #tpu.pipeline_mode<synchronous>, transform_indices = @transform_0, window_bounds = array<i64: 64, 512>}, {transform_indices = @transform_1, window_bounds = array<i64: 512, 128>}, {pipeline_mode = #tpu.pipeline_mode<synchronous>, transform_indices = @transform_2, window_bounds = array<i64: 64, 1>}, {transform_indices = @transform_3, window_bounds = array<i64: 64, 128>}]} {
    %c0 = arith.constant 0 : index
    %c0_0 = arith.constant 0 : index
    %0 = vector.load %arg1[%c0, %c0_0] : memref<64x512xbf16, #tpu.memory_space<vmem>>, vector<64x512xbf16>
    %c0_1 = arith.constant 0 : index
    %c0_2 = arith.constant 0 : index
    %1 = vector.load %arg2[%c0_1, %c0_2] : memref<512x128xbf16, #tpu.memory_space<vmem>>, vector<512x128xbf16>
    %cst = arith.constant dense<0.000000e+00> : vector<64x128xf32>
    %2 = tpu.matmul %0, %1, %cst {dimension_numbers = #tpu.dot_dimension_numbers<[1], [0], [0], [1], [0, 0, 1, 1], [], []>} : vector<64x512xbf16>, vector<512x128xbf16>, vector<64x128xf32> -> vector<64x128xf32>
    %c0_3 = arith.constant 0 : index
    %c0_4 = arith.constant 0 : index
    %3 = vector.load %arg3[%c0_3, %c0_4] : memref<64x1xf32, #tpu.memory_space<vmem>>, vector<64x1xf32>
    %4 = vector.broadcast %3 : vector<64x1xf32> to vector<64x128xf32>
    %5 = arith.addf %2, %4 : vector<64x128xf32>
    %cst_5 = arith.constant 0.000000e+00 : f32
    %6 = vector.broadcast %cst_5 : f32 to vector<64x128xf32>
    %7 = arith.maximumf %5, %6 : vector<64x128xf32>
    %8 = arith.truncf %7 : vector<64x128xf32> to vector<64x128xbf16>
    %c0_6 = arith.constant 0 : index
    %c0_7 = arith.constant 0 : index
    %9 = vector.load %arg4[%c0_6, %c0_7] : memref<64x128xbf16, #tpu.memory_space<vmem>>, vector<64x128xbf16>
    tpu.vector_store %arg4[%c0_6, %c0_7], %8 {strides = array<i32>} : memref<64x128xbf16, #tpu.memory_space<vmem>>, vector<64x128xbf16>,
    return
  }
  func.func @transform_0(%arg0: i32) -> (i32, i32) {
    %c0_i32 = arith.constant 0 : i32
    %c0_i32_0 = arith.constant 0 : i32
    %c0_i32_1 = arith.constant 0 : i32
    return %c0_i32, %c0_i32_0 : i32, i32
  }
  func.func @transform_1(%arg0: i32) -> (i32, i32) {
    %c0_i32 = arith.constant 0 : i32
    %c0_i32_0 = arith.constant 0 : i32
    return %c0_i32, %arg0 : i32, i32
  }
  func.func @transform_2(%arg0: i32) -> (i32, i32) {
    %c0_i32 = arith.constant 0 : i32
    %c0_i32_0 = arith.constant 0 : i32
    %c0_i32_1 = arith.constant 0 : i32
    return %c0_i32, %c0_i32_0 : i32, i32
  }
  func.func @transform_3(%arg0: i32) -> (i32, i32) {
    %c0_i32 = arith.constant 0 : i32
    %c0_i32_0 = arith.constant 0 : i32
    return %c0_i32, %arg0 : i32, i32
  }
}

module attributes {stable_mosaic.version = 11 : i64} {
  func.func @_matmul_t_kernel(%arg0: i32, %arg1: memref<64x576xbf16, #tpu.memory_space<vmem>>, %arg2: memref<576x128xbf16, #tpu.memory_space<vmem>>, %arg3: memref<64x1xf32, #tpu.memory_space<vmem>>, %arg4: memref<64x128xbf16, #tpu.memory_space<vmem>>) attributes {dimension_semantics = [#tpu.dimension_semantics<parallel>], iteration_bounds = array<i64: 1>, scalar_prefetch = 0 : i64, scratch_operands = 0 : i64, tpu.core_type = #tpu.core_type<tc>, window_params = [{pipeline_mode = #tpu.pipeline_mode<synchronous>, transform_indices = @transform_0, window_bounds = array<i64: 64, 576>}, {transform_indices = @transform_1, window_bounds = array<i64: 576, 128>}, {pipeline_mode = #tpu.pipeline_mode<synchronous>, transform_indices = @transform_2, window_bounds = array<i64: 64, 1>}, {transform_indices = @transform_3, window_bounds = array<i64: 64, 128>}]} {
    %c0 = arith.constant 0 : index
    %c0_0 = arith.constant 0 : index
    %0 = vector.load %arg1[%c0, %c0_0] : memref<64x576xbf16, #tpu.memory_space<vmem>>, vector<64x576xbf16>
    %c0_1 = arith.constant 0 : index
    %c0_2 = arith.constant 0 : index
    %1 = vector.load %arg2[%c0_1, %c0_2] : memref<576x128xbf16, #tpu.memory_space<vmem>>, vector<576x128xbf16>
    %cst = arith.constant dense<0.000000e+00> : vector<64x128xf32>
    %2 = tpu.matmul %0, %1, %cst {dimension_numbers = #tpu.dot_dimension_numbers<[1], [0], [0], [1], [0, 0, 1, 1], [], []>} : vector<64x576xbf16>, vector<576x128xbf16>, vector<64x128xf32> -> vector<64x128xf32>
    %c0_3 = arith.constant 0 : index
    %c0_4 = arith.constant 0 : index
    %3 = vector.load %arg3[%c0_3, %c0_4] : memref<64x1xf32, #tpu.memory_space<vmem>>, vector<64x1xf32>
    %4 = vector.broadcast %3 : vector<64x1xf32> to vector<64x128xf32>
    %5 = arith.addf %2, %4 : vector<64x128xf32>
    %cst_5 = arith.constant 0.000000e+00 : f32
    %6 = vector.broadcast %cst_5 : f32 to vector<64x128xf32>
    %7 = arith.maximumf %5, %6 : vector<64x128xf32>
    %8 = arith.truncf %7 : vector<64x128xf32> to vector<64x128xbf16>
    %c0_6 = arith.constant 0 : index
    %c0_7 = arith.constant 0 : index
    %9 = vector.load %arg4[%c0_6, %c0_7] : memref<64x128xbf16, #tpu.memory_space<vmem>>, vector<64x128xbf16>
    tpu.vector_store %arg4[%c0_6, %c0_7], %8 {strides = array<i32>} : memref<64x128xbf16, #tpu.memory_space<vmem>>, vector<64x128xbf16>,
    return
  }
  func.func @transform_0(%arg0: i32) -> (i32, i32) {
    %c0_i32 = arith.constant 0 : i32
    %c0_i32_0 = arith.constant 0 : i32
    %c0_i32_1 = arith.constant 0 : i32
    return %c0_i32, %c0_i32_0 : i32, i32
  }
  func.func @transform_1(%arg0: i32) -> (i32, i32) {
    %c0_i32 = arith.constant 0 : i32
    %c0_i32_0 = arith.constant 0 : i32
    return %c0_i32, %arg0 : i32, i32
  }
  func.func @transform_2(%arg0: i32) -> (i32, i32) {
    %c0_i32 = arith.constant 0 : i32
    %c0_i32_0 = arith.constant 0 : i32
    %c0_i32_1 = arith.constant 0 : i32
    return %c0_i32, %c0_i32_0 : i32, i32
  }
  func.func @transform_3(%arg0: i32) -> (i32, i32) {
    %c0_i32 = arith.constant 0 : i32
    %c0_i32_0 = arith.constant 0 : i32
    return %c0_i32, %arg0 : i32, i32
  }
}

module attributes {stable_mosaic.version = 11 : i64} {
  func.func @_fc_head_kernel(%arg0: i32, %arg1: memref<64x128xbf16, #tpu.memory_space<vmem>>, %arg2: memref<512x64xbf16, #tpu.memory_space<vmem>>, %arg3: memref<512x1xf32, #tpu.memory_space<vmem>>, %arg4: memref<6x512xbf16, #tpu.memory_space<vmem>>, %arg5: memref<6x1xf32, #tpu.memory_space<vmem>>, %arg6: memref<6x128xf32, #tpu.memory_space<vmem>>) attributes {dimension_semantics = [#tpu.dimension_semantics<parallel>], iteration_bounds = array<i64: 1>, scalar_prefetch = 0 : i64, scratch_operands = 0 : i64, tpu.core_type = #tpu.core_type<tc>, window_params = [{transform_indices = @transform_0, window_bounds = array<i64: 64, 128>}, {pipeline_mode = #tpu.pipeline_mode<synchronous>, transform_indices = @transform_1, window_bounds = array<i64: 512, 64>}, {pipeline_mode = #tpu.pipeline_mode<synchronous>, transform_indices = @transform_2, window_bounds = array<i64: 512, 1>}, {pipeline_mode = #tpu.pipeline_mode<synchronous>, transform_indices = @transform_3, window_bounds = array<i64: 6, 512>}, {pipeline_mode = #tpu.pipeline_mode<synchronous>, transform_indices = @transform_4, window_bounds = array<i64: 6, 1>}, {transform_indices = @transform_5, window_bounds = array<i64: 6, 128>}]} {
    %c0 = arith.constant 0 : index
    %c0_0 = arith.constant 0 : index
    %0 = vector.load %arg2[%c0, %c0_0] : memref<512x64xbf16, #tpu.memory_space<vmem>>, vector<512x64xbf16>
    %c0_1 = arith.constant 0 : index
    %c0_2 = arith.constant 0 : index
    %1 = vector.load %arg1[%c0_1, %c0_2] : memref<64x128xbf16, #tpu.memory_space<vmem>>, vector<64x128xbf16>
    %cst = arith.constant dense<0.000000e+00> : vector<512x128xf32>
    %2 = tpu.matmul %0, %1, %cst {dimension_numbers = #tpu.dot_dimension_numbers<[1], [0], [0], [1], [0, 0, 1, 1], [], []>} : vector<512x64xbf16>, vector<64x128xbf16>, vector<512x128xf32> -> vector<512x128xf32>
    %c0_3 = arith.constant 0 : index
    %c0_4 = arith.constant 0 : index
    %3 = vector.load %arg3[%c0_3, %c0_4] : memref<512x1xf32, #tpu.memory_space<vmem>>, vector<512x1xf32>
    %4 = vector.broadcast %3 : vector<512x1xf32> to vector<512x128xf32>
    %5 = arith.addf %2, %4 : vector<512x128xf32>
    %cst_5 = arith.constant 0.000000e+00 : f32
    %6 = vector.broadcast %cst_5 : f32 to vector<512x128xf32>
    %7 = arith.maximumf %5, %6 : vector<512x128xf32>
    %8 = arith.truncf %7 : vector<512x128xf32> to vector<512x128xbf16>
    %c0_6 = arith.constant 0 : index
    %c0_7 = arith.constant 0 : index
    %9 = vector.load %arg4[%c0_6, %c0_7] : memref<6x512xbf16, #tpu.memory_space<vmem>>, vector<6x512xbf16>
    %cst_8 = arith.constant dense<0.000000e+00> : vector<6x128xf32>
    %10 = tpu.matmul %9, %8, %cst_8 {dimension_numbers = #tpu.dot_dimension_numbers<[1], [0], [0], [1], [0, 0, 1, 1], [], []>} : vector<6x512xbf16>, vector<512x128xbf16>, vector<6x128xf32> -> vector<6x128xf32>
    %c0_9 = arith.constant 0 : index
    %c0_10 = arith.constant 0 : index
    %11 = vector.load %arg5[%c0_9, %c0_10] : memref<6x1xf32, #tpu.memory_space<vmem>>, vector<6x1xf32>
    %12 = vector.broadcast %11 : vector<6x1xf32> to vector<6x128xf32>
    %13 = arith.addf %10, %12 : vector<6x128xf32>
    %c0_11 = arith.constant 0 : index
    %c0_12 = arith.constant 0 : index
    %14 = vector.load %arg6[%c0_11, %c0_12] : memref<6x128xf32, #tpu.memory_space<vmem>>, vector<6x128xf32>
    tpu.vector_store %arg6[%c0_11, %c0_12], %13 {strides = array<i32>} : memref<6x128xf32, #tpu.memory_space<vmem>>, vector<6x128xf32>,
    return
  }
  func.func @transform_0(%arg0: i32) -> (i32, i32) {
    %c0_i32 = arith.constant 0 : i32
    %c0_i32_0 = arith.constant 0 : i32
    return %c0_i32, %arg0 : i32, i32
  }
  func.func @transform_1(%arg0: i32) -> (i32, i32) {
    %c0_i32 = arith.constant 0 : i32
    %c0_i32_0 = arith.constant 0 : i32
    %c0_i32_1 = arith.constant 0 : i32
    return %c0_i32, %c0_i32_0 : i32, i32
  }
  func.func @transform_2(%arg0: i32) -> (i32, i32) {
    %c0_i32 = arith.constant 0 : i32
    %c0_i32_0 = arith.constant 0 : i32
    %c0_i32_1 = arith.constant 0 : i32
    return %c0_i32, %c0_i32_0 : i32, i32
  }
  func.func @transform_3(%arg0: i32) -> (i32, i32) {
    %c0_i32 = arith.constant 0 : i32
    %c0_i32_0 = arith.constant 0 : i32
    %c0_i32_1 = arith.constant 0 : i32
    return %c0_i32, %c0_i32_0 : i32, i32
  }
  func.func @transform_4(%arg0: i32) -> (i32, i32) {
    %c0_i32 = arith.constant 0 : i32
    %c0_i32_0 = arith.constant 0 : i32
    %c0_i32_1 = arith.constant 0 : i32
    return %c0_i32, %c0_i32_0 : i32, i32
  }
  func.func @transform_5(%arg0: i32) -> (i32, i32) {
    %c0_i32 = arith.constant 0 : i32
    %c0_i32_0 = arith.constant 0 : i32
    return %c0_i32, %arg0 : i32, i32
  }
}

</mosaic_0001>

<llo_original>
// kernel: actor_forward.4
$region0: #{actor_forward.4}
  #allocation0 [shape = 'u32[]', space=smem, size = 0x4, offset = 0x4, fixed_abs, tag = 'smem constant byte address 0x4 - core index']
  #allocation1 [shape = 'u32[72,128]{1,0:T(1,128)}', space=vmem, size = 0x9000, scoped, tag = 'internal scratch']
  %s0 = inlined_call_operand.vmem [shape: bf16[32,256], index: 0, kind: input, shape index: {}]
  %s1 = inlined_call_operand.vmem [shape: bf16[256,128], index: 1, kind: input, shape index: {}]
  %s2 = inlined_call_operand.vmem [shape: f32[32,1], index: 2, kind: input, shape index: {}]
  %s3 = inlined_call_operand.vmem [shape: bf16[32,128], index: 3, kind: output, shape index: {}]
  %s4 = sld [smem:[#allocation0]]
  $region22: #{actor_forward.4} parent=0
    _
  %s6 = ssub.s32 1, %s4
  %s7 = scalar_select 0, %s6, %s4
  // Predicated region
  $region2: #{actor_forward.4} parent=0 // pred_check
    _
  $region3: #{actor_forward.4} parent=0 // pred_check_branch
    %9 = sbr.rel (0) target = $region5
  $region4: #{actor_forward.4} parent=0 // pred_region
    _
  $region5: #{actor_forward.4} parent=0 // pred_fallthru
    _
  // Predicated region
  $region6: #{actor_forward.4} parent=0 // pred_check
    _
  $region7: #{actor_forward.4} parent=0 // pred_check_branch
    %11 = sbr.rel (0) target = $region9
  $region8: #{actor_forward.4} parent=0 // pred_region
    _
  $region9: #{actor_forward.4} parent=0 // pred_fallthru
    _
  // Predicated region
  $region10: #{actor_forward.4} parent=0 // pred_check
    _
  $region11: #{actor_forward.4} parent=0 // pred_check_branch
    %13 = sbr.rel (0) target = $region13
  $region12: #{actor_forward.4} parent=0 // pred_region
    _
  $region13: #{actor_forward.4} parent=0 // pred_fallthru
    _
  %v14 = vld [vmem:[%s0] sm:$0xff]
  %v15 = vld [vmem:[%s0 + $0x8] sm:$0xff]
  %v16 = vld [vmem:[%s0 + $0x10] sm:$0xff]
  %v17 = vld [vmem:[%s0 + $0x18] sm:$0xff]
  %v18 = vld [vmem:[%s1] sm:$0xf]
  %v19 = vld [vmem:[%s1 + $0x4] sm:$0xf]
  %v20 = vld [vmem:[%s1 + $0x8] sm:$0xf]
  %v21 = vld [vmem:[%s1 + $0xc] sm:$0xf]
  %v22 = vld [vmem:[%s1 + $0x10] sm:$0xf]
  %v23 = vld [vmem:[%s1 + $0x14] sm:$0xf]
  %v24 = vld [vmem:[%s1 + $0x18] sm:$0xf]
  %v25 = vld [vmem:[%s1 + $0x1c] sm:$0xf]
  %v26 = vld [vmem:[%s1 + $0x20] sm:$0xf]
  %v27 = vld [vmem:[%s1 + $0x24] sm:$0xf]
  %v28 = vld [vmem:[%s1 + $0x28] sm:$0xf]
  %v29 = vld [vmem:[%s1 + $0x2c] sm:$0xf]
  %v30 = vld [vmem:[%s1 + $0x30] sm:$0xf]
  %v31 = vld [vmem:[%s1 + $0x34] sm:$0xf]
  %v32 = vld [vmem:[%s1 + $0x38] sm:$0xf]
  %v33 = vld [vmem:[%s1 + $0x3c] sm:$0xf]
  %v34 = vld [vmem:[%s1 + $0x40] sm:$0xf]
  %v35 = vld [vmem:[%s1 + $0x44] sm:$0xf]
  %v36 = vld [vmem:[%s1 + $0x48] sm:$0xf]
  %v37 = vld [vmem:[%s1 + $0x4c] sm:$0xf]
  %v38 = vld [vmem:[%s1 + $0x50] sm:$0xf]
  %v39 = vld [vmem:[%s1 + $0x54] sm:$0xf]
  %v40 = vld [vmem:[%s1 + $0x58] sm:$0xf]
  %v41 = vld [vmem:[%s1 + $0x5c] sm:$0xf]
  %v42 = vld [vmem:[%s1 + $0x60] sm:$0xf]
  %v43 = vld [vmem:[%s1 + $0x64] sm:$0xf]
  %v44 = vld [vmem:[%s1 + $0x68] sm:$0xf]
  %v45 = vld [vmem:[%s1 + $0x6c] sm:$0xf]
  %v46 = vld [vmem:[%s1 + $0x70] sm:$0xf]
  %v47 = vld [vmem:[%s1 + $0x74] sm:$0xf]
  %v48 = vld [vmem:[%s1 + $0x78] sm:$0xf]
  %v49 = vld [vmem:[%s1 + $0x7c] sm:$0xf]
  %v50 = vld [vmem:[%s2] sm:$0xff]
  %v51 = vld [vmem:[%s2 + $0x8] sm:$0xff]
  %v52 = vld [vmem:[%s2 + $0x10] sm:$0xff]
  %v53 = vld [vmem:[%s2 + $0x18] sm:$0xff]
  %55 = vset.pattern.permute.xlu0 0
  %56 = vperm.xlu0 %55, %v50
  %v57 = vpop.permute.xlu0 %56
  %60 = vset.pattern.permute.xlu0 0
  %61 = vperm.xlu0 %60, %v51
  %v62 = vpop.permute.xlu0 %61
  %65 = vset.pattern.permute.xlu0 0
  %66 = vperm.xlu0 %65, %v52
  %v67 = vpop.permute.xlu0 %66
  %70 = vset.pattern.permute.xlu0 0
  %71 = vperm.xlu0 %70, %v53
  %v72 = vpop.permute.xlu0 %71
  %v78 = vunpack.c.l.b16 %v14
  %v79 = vunpack.c.h.b16 %v14
  %v80 = vunpack.c.l.b16 %v15
  %v81 = vunpack.c.h.b16 %v15
  %v82 = vunpack.c.l.b16 %v16
  %v83 = vunpack.c.h.b16 %v16
  %v84 = vunpack.c.l.b16 %v17
  %v85 = vunpack.c.h.b16 %v17
  %v86 = vpack.c.b16 %v80, %v78
  %v87 = vpack.c.b16 %v81, %v79
  %v88 = vpack.c.b16 %v84, %v82
  %v89 = vpack.c.b16 %v85, %v83
  %v126 = vunpack.c.l.b16 %v18
  %v127 = vunpack.c.l.b16 %v19
  %v128 = vunpack.c.l.b16 %v20
  %v129 = vunpack.c.l.b16 %v21
  %v130 = vunpack.c.l.b16 %v22
  %v131 = vunpack.c.l.b16 %v23
  %v132 = vunpack.c.l.b16 %v24
  %v133 = vunpack.c.l.b16 %v25
  %v134 = vunpack.c.l.b16 %v26
  %v135 = vunpack.c.l.b16 %v27
  %v136 = vunpack.c.l.b16 %v28
  %v137 = vunpack.c.l.b16 %v29
  %v138 = vunpack.c.l.b16 %v30
  %v139 = vunpack.c.l.b16 %v31
  %v140 = vunpack.c.l.b16 %v32
  %v141 = vunpack.c.l.b16 %v33
  %v142 = vunpack.c.l.b16 %v34
  %v143 = vunpack.c.l.b16 %v35
  %v144 = vunpack.c.l.b16 %v36
  %v145 = vunpack.c.l.b16 %v37
  %v146 = vunpack.c.l.b16 %v38
  %v147 = vunpack.c.l.b16 %v39
  %v148 = vunpack.c.l.b16 %v40
  %v149 = vunpack.c.l.b16 %v41
  %v150 = vunpack.c.l.b16 %v42
  %v151 = vunpack.c.l.b16 %v43
  %v152 = vunpack.c.l.b16 %v44
  %v153 = vunpack.c.l.b16 %v45
  %v154 = vunpack.c.l.b16 %v46
  %v155 = vunpack.c.l.b16 %v47
  %v156 = vunpack.c.l.b16 %v48
  %v157 = vunpack.c.l.b16 %v49
  %v158 = vpack.c.b16 %v127, %v126
  %v159 = vpack.c.b16 %v129, %v128
  %v160 = vpack.c.b16 %v131, %v130
  %v161 = vpack.c.b16 %v133, %v132
  %v162 = vpack.c.b16 %v135, %v134
  %v163 = vpack.c.b16 %v137, %v136
  %v164 = vpack.c.b16 %v139, %v138
  %v165 = vpack.c.b16 %v141, %v140
  %v166 = vpack.c.b16 %v143, %v142
  %v167 = vpack.c.b16 %v145, %v144
  %v168 = vpack.c.b16 %v147, %v146
  %v169 = vpack.c.b16 %v149, %v148
  %v170 = vpack.c.b16 %v151, %v150
  %v171 = vpack.c.b16 %v153, %v152
  %v172 = vpack.c.b16 %v155, %v154
  %v173 = vpack.c.b16 %v157, %v156
  %190 = vmatpush.bf16.msra.mxu0 %v165
  %191 = vmatpush.bf16.msra.mxu0 %v164
  %192 = vmatpush.bf16.msra.mxu0 %v163
  %193 = vmatpush.bf16.msra.mxu0 %v162
  %194 = vmatpush.bf16.msra.mxu0 %v161
  %195 = vmatpush.bf16.msra.mxu0 %v160
  %196 = vmatpush.bf16.msra.mxu0 %v159
  %197 = vmatpush.bf16.msra.mxu0 %v158
  %198 = vmatmul.bf16.gmra.mxu0 %v86
  %v199 = vpop.f32.mrf.mxu0
  %v200 = vadd.f32 %v57, %v199
  %v201 = vpop.f32.mrf.mxu0
  %v202 = vadd.f32 %v62, %v201
  %203 = vmatmul.bf16.gmra.mxu0 %v88
  %v204 = vpop.f32.mrf.mxu0
  %v205 = vadd.f32 %v67, %v204
  %v206 = vpop.f32.mrf.mxu0
  %v207 = vadd.f32 %v72, %v206
  %208 = vdwg.mxu0
  %209 = vmatpush.bf16.msra.mxu0 %v173
  %210 = vmatpush.bf16.msra.mxu0 %v172
  %211 = vmatpush.bf16.msra.mxu0 %v171
  %212 = vmatpush.bf16.msra.mxu0 %v170
  %213 = vmatpush.bf16.msra.mxu0 %v169
  %214 = vmatpush.bf16.msra.mxu0 %v168
  %215 = vmatpush.bf16.msra.mxu0 %v167
  %216 = vmatpush.bf16.msra.mxu0 %v166
  %217 = vmatmul.bf16.gmra.mxu0 %v87
  %v218 = vpop.f32.mrf.mxu0
  %v219 = vadd.f32 %v200, %v218
  %v220 = vpop.f32.mrf.mxu0
  %v221 = vadd.f32 %v202, %v220
  %222 = vmatmul.bf16.gmra.mxu0 %v89
  %v223 = vpop.f32.mrf.mxu0
  %v224 = vadd.f32 %v205, %v223
  %v225 = vpop.f32.mrf.mxu0
  %v226 = vadd.f32 %v207, %v225
  %227 = vdwg.mxu0
  %v228 = vmax.f32 %v219, 0.0
  %v229 = vmax.f32 %v221, 0.0
  %v230 = vmax.f32 %v224, 0.0
  %v231 = vmax.f32 %v226, 0.0
  %v232 = vpack.c.bf16 %v228, %v228
  %v233 = vpack.c.bf16 %v229, %v229
  %v234 = vpack.c.bf16 %v230, %v230
  %v235 = vpack.c.bf16 %v231, %v231
  %236 = vst [vmem:[%s3] sm:$0xf] %v232
  %237 = vst [vmem:[%s3 + $0x4] sm:$0xf] %v233
  %238 = vst [vmem:[%s3 + $0x8] sm:$0xf] %v234
  %239 = vst [vmem:[%s3 + $0xc] sm:$0xf] %v235
  // Predicated region
  $region14: #{actor_forward.4} parent=0 // pred_check
    _
  $region15: #{actor_forward.4} parent=0 // pred_check_branch
    %241 = sbr.rel (0) target = $region17
  $region16: #{actor_forward.4} parent=0 // pred_region
    _
  $region17: #{actor_forward.4} parent=0 // pred_fallthru
    _
  // Predicated region
  $region18: #{actor_forward.4} parent=0 // pred_check
    _
  $region19: #{actor_forward.4} parent=0 // pred_check_branch
    %243 = sbr.rel (0) target = $region21
  $region20: #{actor_forward.4} parent=0 // pred_region
    _
  $region21: #{actor_forward.4} parent=0 // pred_fallthru
    _

// kernel: actor_forward.5
$region0: #{actor_forward.5}
  #allocation0 [shape = 'u32[]', space=smem, size = 0x4, offset = 0x4, fixed_abs, tag = 'smem constant byte address 0x4 - core index']
  #allocation1 [shape = 'u32[72,128]{1,0:T(1,128)}', space=vmem, size = 0x9000, scoped, tag = 'internal scratch']
  %s0 = inlined_call_operand.vmem [shape: bf16[64,512], index: 0, kind: input, shape index: {}]
  %s1 = inlined_call_operand.vmem [shape: bf16[512,128], index: 1, kind: input, shape index: {}]
  %s2 = inlined_call_operand.vmem [shape: f32[64,1], index: 2, kind: input, shape index: {}]
  %s3 = inlined_call_operand.vmem [shape: bf16[64,128], index: 3, kind: output, shape index: {}]
  %s4 = sld [smem:[#allocation0]]
  $region22: #{actor_forward.5} parent=0
    _
  %s6 = ssub.s32 1, %s4
  %s7 = scalar_select 0, %s6, %s4
  // Predicated region
  $region2: #{actor_forward.5} parent=0 // pred_check
    _
  $region3: #{actor_forward.5} parent=0 // pred_check_branch
    %9 = sbr.rel (0) target = $region5
  $region4: #{actor_forward.5} parent=0 // pred_region
    _
  $region5: #{actor_forward.5} parent=0 // pred_fallthru
    _
  // Predicated region
  $region6: #{actor_forward.5} parent=0 // pred_check
    _
  $region7: #{actor_forward.5} parent=0 // pred_check_branch
    %11 = sbr.rel (0) target = $region9
  $region8: #{actor_forward.5} parent=0 // pred_region
    _
  $region9: #{actor_forward.5} parent=0 // pred_fallthru
    _
  // Predicated region
  $region10: #{actor_forward.5} parent=0 // pred_check
    _
  $region11: #{actor_forward.5} parent=0 // pred_check_branch
    %13 = sbr.rel (0) target = $region13
  $region12: #{actor_forward.5} parent=0 // pred_region
    _
  $region13: #{actor_forward.5} parent=0 // pred_fallthru
    _
  %v14 = vld [vmem:[%s0] sm:$0xff]
  %v15 = vld [vmem:[%s0 + $0x8] sm:$0xff]
  %v16 = vld [vmem:[%s0 + $0x10] sm:$0xff]
  %v17 = vld [vmem:[%s0 + $0x18] sm:$0xff]
  %v18 = vld [vmem:[%s0 + $0x20] sm:$0xff]
  %v19 = vld [vmem:[%s0 + $0x28] sm:$0xff]
  %v20 = vld [vmem:[%s0 + $0x30] sm:$0xff]
  %v21 = vld [vmem:[%s0 + $0x38] sm:$0xff]
  %v22 = vld [vmem:[%s0 + $0x40] sm:$0xff]
  %v23 = vld [vmem:[%s0 + $0x48] sm:$0xff]
  %v24 = vld [vmem:[%s0 + $0x50] sm:$0xff]
  %v25 = vld [vmem:[%s0 + $0x58] sm:$0xff]
  %v26 = vld [vmem:[%s0 + $0x60] sm:$0xff]
  %v27 = vld [vmem:[%s0 + $0x68] sm:$0xff]
  %v28 = vld [vmem:[%s0 + $0x70] sm:$0xff]
  %v29 = vld [vmem:[%s0 + $0x78] sm:$0xff]
  %v30 = vld [vmem:[%s1] sm:$0xf]
  %v31 = vld [vmem:[%s1 + $0x4] sm:$0xf]
  %v32 = vld [vmem:[%s1 + $0x8] sm:$0xf]
  %v33 = vld [vmem:[%s1 + $0xc] sm:$0xf]
  %v34 = vld [vmem:[%s1 + $0x10] sm:$0xf]
  %v35 = vld [vmem:[%s1 + $0x14] sm:$0xf]
  %v36 = vld [vmem:[%s1 + $0x18] sm:$0xf]
  %v37 = vld [vmem:[%s1 + $0x1c] sm:$0xf]
  %v38 = vld [vmem:[%s1 + $0x20] sm:$0xf]
  %v39 = vld [vmem:[%s1 + $0x24] sm:$0xf]
  %v40 = vld [vmem:[%s1 + $0x28] sm:$0xf]
  %v41 = vld [vmem:[%s1 + $0x2c] sm:$0xf]
  %v42 = vld [vmem:[%s1 + $0x30] sm:$0xf]
  %v43 = vld [vmem:[%s1 + $0x34] sm:$0xf]
  %v44 = vld [vmem:[%s1 + $0x38] sm:$0xf]
  %v45 = vld [vmem:[%s1 + $0x3c] sm:$0xf]
  %v46 = vld [vmem:[%s1 + $0x40] sm:$0xf]
  %v47 = vld [vmem:[%s1 + $0x44] sm:$0xf]
  %v48 = vld [vmem:[%s1 + $0x48] sm:$0xf]
  %v49 = vld [vmem:[%s1 + $0x4c] sm:$0xf]
  %v50 = vld [vmem:[%s1 + $0x50] sm:$0xf]
  %v51 = vld [vmem:[%s1 + $0x54] sm:$0xf]
  %v52 = vld [vmem:[%s1 + $0x58] sm:$0xf]
  %v53 = vld [vmem:[%s1 + $0x5c] sm:$0xf]
  %v54 = vld [vmem:[%s1 + $0x60] sm:$0xf]
  %v55 = vld [vmem:[%s1 + $0x64] sm:$0xf]
  %v56 = vld [vmem:[%s1 + $0x68] sm:$0xf]
  %v57 = vld [vmem:[%s1 + $0x6c] sm:$0xf]
  %v58 = vld [vmem:[%s1 + $0x70] sm:$0xf]
  %v59 = vld [vmem:[%s1 + $0x74] sm:$0xf]
  %v60 = vld [vmem:[%s1 + $0x78] sm:$0xf]
  %v61 = vld [vmem:[%s1 + $0x7c] sm:$0xf]
  %v62 = vld [vmem:[%s1 + $0x80] sm:$0xf]
  %v63 = vld [vmem:[%s1 + $0x84] sm:$0xf]
  %v64 = vld [vmem:[%s1 + $0x88] sm:$0xf]
  %v65 = vld [vmem:[%s1 + $0x8c] sm:$0xf]
  %v66 = vld [vmem:[%s1 + $0x90] sm:$0xf]
  %v67 = vld [vmem:[%s1 + $0x94] sm:$0xf]
  %v68 = vld [vmem:[%s1 + $0x98] sm:$0xf]
  %v69 = vld [vmem:[%s1 + $0x9c] sm:$0xf]
  %v70 = vld [vmem:[%s1 + $0xa0] sm:$0xf]
  %v71 = vld [vmem:[%s1 + $0xa4] sm:$0xf]
  %v72 = vld [vmem:[%s1 + $0xa8] sm:$0xf]
  %v73 = vld [vmem:[%s1 + $0xac] sm:$0xf]
  %v74 = vld [vmem:[%s1 + $0xb0] sm:$0xf]
  %v75 = vld [vmem:[%s1 + $0xb4] sm:$0xf]
  %v76 = vld [vmem:[%s1 + $0xb8] sm:$0xf]
  %v77 = vld [vmem:[%s1 + $0xbc] sm:$0xf]
  %v78 = vld [vmem:[%s1 + $0xc0] sm:$0xf]
  %v79 = vld [vmem:[%s1 + $0xc4] sm:$0xf]
  %v80 = vld [vmem:[%s1 + $0xc8] sm:$0xf]
  %v81 = vld [vmem:[%s1 + $0xcc] sm:$0xf]
  %v82 = vld [vmem:[%s1 + $0xd0] sm:$0xf]
  %v83 = vld [vmem:[%s1 + $0xd4] sm:$0xf]
  %v84 = vld [vmem:[%s1 + $0xd8] sm:$0xf]
  %v85 = vld [vmem:[%s1 + $0xdc] sm:$0xf]
  %v86 = vld [vmem:[%s1 + $0xe0] sm:$0xf]
  %v87 = vld [vmem:[%s1 + $0xe4] sm:$0xf]
  %v88 = vld [vmem:[%s1 + $0xe8] sm:$0xf]
  %v89 = vld [vmem:[%s1 + $0xec] sm:$0xf]
  %v90 = vld [vmem:[%s1 + $0xf0] sm:$0xf]
  %v91 = vld [vmem:[%s1 + $0xf4] sm:$0xf]
  %v92 = vld [vmem:[%s1 + $0xf8] sm:$0xf]
  %v93 = vld [vmem:[%s1 + $0xfc] sm:$0xf]
  %v94 = vld [vmem:[%s2] sm:$0xff]
  %v95 = vld [vmem:[%s2 + $0x8] sm:$0xff]
  %v96 = vld [vmem:[%s2 + $0x10] sm:$0xff]
  %v97 = vld [vmem:[%s2 + $0x18] sm:$0xff]
  %v98 = vld [vmem:[%s2 + $0x20] sm:$0xff]
  %v99 = vld [vmem:[%s2 + $0x28] sm:$0xff]
  %v100 = vld [vmem:[%s2 + $0x30] sm:$0xff]
  %v101 = vld [vmem:[%s2 + $0x38] sm:$0xff]
  %103 = vset.pattern.permute.xlu0 0
  %104 = vperm.xlu0 %103, %v94
  %v105 = vpop.permute.xlu0 %104
  %108 = vset.pattern.permute.xlu0 0
  %109 = vperm.xlu0 %108, %v95
  %v110 = vpop.permute.xlu0 %109
  %113 = vset.pattern.permute.xlu0 0
  %114 = vperm.xlu0 %113, %v96
  %v115 = vpop.permute.xlu0 %114
  %118 = vset.pattern.permute.xlu0 0
  %119 = vperm.xlu0 %118, %v97
  %v120 = vpop.permute.xlu0 %119
  %123 = vset.pattern.permute.xlu0 0
  %124 = vperm.xlu0 %123, %v98
  %v125 = vpop.permute.xlu0 %124
  %128 = vset.pattern.permute.xlu0 0
  %129 = vperm.xlu0 %128, %v99
  %v130 = vpop.permute.xlu0 %129
  %133 = vset.pattern.permute.xlu0 0
  %134 = vperm.xlu0 %133, %v100
  %v135 = vpop.permute.xlu0 %134
  %138 = vset.pattern.permute.xlu0 0
  %139 = vperm.xlu0 %138, %v101
  %v140 = vpop.permute.xlu0 %139
  %v158 = vunpack.c.l.b16 %v14
  %v159 = vunpack.c.h.b16 %v14
  %v160 = vunpack.c.l.b16 %v15
  %v161 = vunpack.c.h.b16 %v15
  %v162 = vunpack.c.l.b16 %v16
  %v163 = vunpack.c.h.b16 %v16
  %v164 = vunpack.c.l.b16 %v17
  %v165 = vunpack.c.h.b16 %v17
  %v166 = vunpack.c.l.b16 %v18
  %v167 = vunpack.c.h.b16 %v18
  %v168 = vunpack.c.l.b16 %v19
  %v169 = vunpack.c.h.b16 %v19
  %v170 = vunpack.c.l.b16 %v20
  %v171 = vunpack.c.h.b16 %v20
  %v172 = vunpack.c.l.b16 %v21
  %v173 = vunpack.c.h.b16 %v21
  %v174 = vunpack.c.l.b16 %v22
  %v175 = vunpack.c.h.b16 %v22
  %v176 = vunpack.c.l.b16 %v23
  %v177 = vunpack.c.h.b16 %v23
  %v178 = vunpack.c.l.b16 %v24
  %v179 = vunpack.c.h.b16 %v24
  %v180 = vunpack.c.l.b16 %v25
  %v181 = vunpack.c.h.b16 %v25
  %v182 = vunpack.c.l.b16 %v26
  %v183 = vunpack.c.h.b16 %v26
  %v184 = vunpack.c.l.b16 %v27
  %v185 = vunpack.c.h.b16 %v27
  %v186 = vunpack.c.l.b16 %v28
  %v187 = vunpack.c.h.b16 %v28
  %v188 = vunpack.c.l.b16 %v29
  %v189 = vunpack.c.h.b16 %v29
  %v190 = vpack.c.b16 %v162, %v158
  %v191 = vpack.c.b16 %v163, %v159
  %v192 = vpack.c.b16 %v164, %v160
  %v193 = vpack.c.b16 %v165, %v161
  %v194 = vpack.c.b16 %v170, %v166
  %v195 = vpack.c.b16 %v171, %v167
  %v196 = vpack.c.b16 %v172, %v168
  %v197 = vpack.c.b16 %v173, %v169
  %v198 = vpack.c.b16 %v178, %v174
  %v199 = vpack.c.b16 %v179, %v175
  %v200 = vpack.c.b16 %v180, %v176
  %v201 = vpack.c.b16 %v181, %v177
  %v202 = vpack.c.b16 %v186, %v182
  %v203 = vpack.c.b16 %v187, %v183
  %v204 = vpack.c.b16 %v188, %v184
  %v205 = vpack.c.b16 %v189, %v185
  %v286 = vunpack.c.l.b16 %v30
  %v287 = vunpack.c.l.b16 %v31
  %v288 = vunpack.c.l.b16 %v32
  %v289 = vunpack.c.l.b16 %v33
  %v290 = vunpack.c.l.b16 %v34
  %v291 = vunpack.c.l.b16 %v35
  %v292 = vunpack.c.l.b16 %v36
  %v293 = vunpack.c.l.b16 %v37
  %v294 = vunpack.c.l.b16 %v38
  %v295 = vunpack.c.l.b16 %v39
  %v296 = vunpack.c.l.b16 %v40
  %v297 = vunpack.c.l.b16 %v41
  %v298 = vunpack.c.l.b16 %v42
  %v299 = vunpack.c.l.b16 %v43
  %v300 = vunpack.c.l.b16 %v44
  %v301 = vunpack.c.l.b16 %v45
  %v302 = vunpack.c.l.b16 %v46
  %v303 = vunpack.c.l.b16 %v47
  %v304 = vunpack.c.l.b16 %v48
  %v305 = vunpack.c.l.b16 %v49
  %v306 = vunpack.c.l.b16 %v50
  %v307 = vunpack.c.l.b16 %v51
  %v308 = vunpack.c.l.b16 %v52
  %v309 = vunpack.c.l.b16 %v53
  %v310 = vunpack.c.l.b16 %v54
  %v311 = vunpack.c.l.b16 %v55
  %v312 = vunpack.c.l.b16 %v56
  %v313 = vunpack.c.l.b16 %v57
  %v314 = vunpack.c.l.b16 %v58
  %v315 = vunpack.c.l.b16 %v59
  %v316 = vunpack.c.l.b16 %v60
  %v317 = vunpack.c.l.b16 %v61
  %v318 = vunpack.c.l.b16 %v62
  %v319 = vunpack.c.l.b16 %v63
  %v320 = vunpack.c.l.b16 %v64
  %v321 = vunpack.c.l.b16 %v65
  %v322 = vunpack.c.l.b16 %v66
  %v323 = vunpack.c.l.b16 %v67
  %v324 = vunpack.c.l.b16 %v68
  %v325 = vunpack.c.l.b16 %v69
  %v326 = vunpack.c.l.b16 %v70
  %v327 = vunpack.c.l.b16 %v71
  %v328 = vunpack.c.l.b16 %v72
  %v329 = vunpack.c.l.b16 %v73
  %v330 = vunpack.c.l.b16 %v74
  %v331 = vunpack.c.l.b16 %v75
  %v332 = vunpack.c.l.b16 %v76
  %v333 = vunpack.c.l.b16 %v77
  %v334 = vunpack.c.l.b16 %v78
  %v335 = vunpack.c.l.b16 %v79
  %v336 = vunpack.c.l.b16 %v80
  %v337 = vunpack.c.l.b16 %v81
  %v338 = vunpack.c.l.b16 %v82
  %v339 = vunpack.c.l.b16 %v83
  %v340 = vunpack.c.l.b16 %v84
  %v341 = vunpack.c.l.b16 %v85
  %v342 = vunpack.c.l.b16 %v86
  %v343 = vunpack.c.l.b16 %v87
  %v344 = vunpack.c.l.b16 %v88
  %v345 = vunpack.c.l.b16 %v89
  %v346 = vunpack.c.l.b16 %v90
  %v347 = vunpack.c.l.b16 %v91
  %v348 = vunpack.c.l.b16 %v92
  %v349 = vunpack.c.l.b16 %v93
  %v350 = vpack.c.b16 %v287, %v286
  %v351 = vpack.c.b16 %v289, %v288
  %v352 = vpack.c.b16 %v291, %v290
  %v353 = vpack.c.b16 %v293, %v292
  %v354 = vpack.c.b16 %v295, %v294
  %v355 = vpack.c.b16 %v297, %v296
  %v356 = vpack.c.b16 %v299, %v298
  %v357 = vpack.c.b16 %v301, %v300
  %v358 = vpack.c.b16 %v303, %v302
  %v359 = vpack.c.b16 %v305, %v304
  %v360 = vpack.c.b16 %v307, %v306
  %v361 = vpack.c.b16 %v309, %v308
  %v362 = vpack.c.b16 %v311, %v310
  %v363 = vpack.c.b16 %v313, %v312
  %v364 = vpack.c.b16 %v315, %v314
  %v365 = vpack.c.b16 %v317, %v316
  %v366 = vpack.c.b16 %v319, %v318
  %v367 = vpack.c.b16 %v321, %v320
  %v368 = vpack.c.b16 %v323, %v322
  %v369 = vpack.c.b16 %v325, %v324
  %v370 = vpack.c.b16 %v327, %v326
  %v371 = vpack.c.b16 %v329, %v328
  %v372 = vpack.c.b16 %v331, %v330
  %v373 = vpack.c.b16 %v333, %v332
  %v374 = vpack.c.b16 %v335, %v334
  %v375 = vpack.c.b16 %v337, %v336
  %v376 = vpack.c.b16 %v339, %v338
  %v377 = vpack.c.b16 %v341, %v340
  %v378 = vpack.c.b16 %v343, %v342
  %v379 = vpack.c.b16 %v345, %v344
  %v380 = vpack.c.b16 %v347, %v346
  %v381 = vpack.c.b16 %v349, %v348
  %414 = vmatpush.bf16.msra.mxu0 %v357
  %415 = vmatpush.bf16.msra.mxu0 %v356
  %416 = vmatpush.bf16.msra.mxu0 %v355
  %417 = vmatpush.bf16.msra.mxu0 %v354
  %418 = vmatpush.bf16.msra.mxu0 %v353
  %419 = vmatpush.bf16.msra.mxu0 %v352
  %420 = vmatpush.bf16.msra.mxu0 %v351
  %421 = vmatpush.bf16.msra.mxu0 %v350
  %422 = vmatmul.bf16.gmra.mxu0 %v190
  %v423 = vpop.f32.mrf.mxu0
  %v424 = vadd.f32 %v105, %v423
  %v425 = vpop.f32.mrf.mxu0
  %v426 = vadd.f32 %v110, %v425
  %427 = vmatmul.bf16.gmra.mxu0 %v194
  %v428 = vpop.f32.mrf.mxu0
  %v429 = vadd.f32 %v115, %v428
  %v430 = vpop.f32.mrf.mxu0
  %v431 = vadd.f32 %v120, %v430
  %432 = vmatmul.bf16.gmra.mxu0 %v198
  %v433 = vpop.f32.mrf.mxu0
  %v434 = vadd.f32 %v125, %v433
  %v435 = vpop.f32.mrf.mxu0
  %v436 = vadd.f32 %v130, %v435
  %437 = vmatmul.bf16.gmra.mxu0 %v202
  %v438 = vpop.f32.mrf.mxu0
  %v439 = vadd.f32 %v135, %v438
  %v440 = vpop.f32.mrf.mxu0
  %v441 = vadd.f32 %v140, %v440
  %442 = vdwg.mxu0
  %443 = vmatpush.bf16.msra.mxu0 %v365
  %444 = vmatpush.bf16.msra.mxu0 %v364
  %445 = vmatpush.bf16.msra.mxu0 %v363
  %446 = vmatpush.bf16.msra.mxu0 %v362
  %447 = vmatpush.bf16.msra.mxu0 %v361
  %448 = vmatpush.bf16.msra.mxu0 %v360
  %449 = vmatpush.bf16.msra.mxu0 %v359
  %450 = vmatpush.bf16.msra.mxu0 %v358
  %451 = vmatmul.bf16.gmra.mxu0 %v191
  %v452 = vpop.f32.mrf.mxu0
  %v453 = vadd.f32 %v424, %v452
  %v454 = vpop.f32.mrf.mxu0
  %v455 = vadd.f32 %v426, %v454
  %456 = vmatmul.bf16.gmra.mxu0 %v195
  %v457 = vpop.f32.mrf.mxu0
  %v458 = vadd.f32 %v429, %v457
  %v459 = vpop.f32.mrf.mxu0
  %v460 = vadd.f32 %v431, %v459
  %461 = vmatmul.bf16.gmra.mxu0 %v199
  %v462 = vpop.f32.mrf.mxu0
  %v463 = vadd.f32 %v434, %v462
  %v464 = vpop.f32.mrf.mxu0
  %v465 = vadd.f32 %v436, %v464
  %466 = vmatmul.bf16.gmra.mxu0 %v203
  %v467 = vpop.f32.mrf.mxu0
  %v468 = vadd.f32 %v439, %v467
  %v469 = vpop.f32.mrf.mxu0
  %v470 = vadd.f32 %v441, %v469
  %471 = vdwg.mxu0
  %472 = vmatpush.bf16.msra.mxu0 %v373
  %473 = vmatpush.bf16.msra.mxu0 %v372
  %474 = vmatpush.bf16.msra.mxu0 %v371
  %475 = vmatpush.bf16.msra.mxu0 %v370
  %476 = vmatpush.bf16.msra.mxu0 %v369
  %477 = vmatpush.bf16.msra.mxu0 %v368
  %478 = vmatpush.bf16.msra.mxu0 %v367
  %479 = vmatpush.bf16.msra.mxu0 %v366
  %480 = vmatmul.bf16.gmra.mxu0 %v192
  %v481 = vpop.f32.mrf.mxu0
  %v482 = vadd.f32 %v453, %v481
  %v483 = vpop.f32.mrf.mxu0
  %v484 = vadd.f32 %v455, %v483
  %485 = vmatmul.bf16.gmra.mxu0 %v196
  %v486 = vpop.f32.mrf.mxu0
  %v487 = vadd.f32 %v458, %v486
  %v488 = vpop.f32.mrf.mxu0
  %v489 = vadd.f32 %v460, %v488
  %490 = vmatmul.bf16.gmra.mxu0 %v200
  %v491 = vpop.f32.mrf.mxu0
  %v492 = vadd.f32 %v463, %v491
  %v493 = vpop.f32.mrf.mxu0
  %v494 = vadd.f32 %v465, %v493
  %495 = vmatmul.bf16.gmra.mxu0 %v204
  %v496 = vpop.f32.mrf.mxu0
  %v497 = vadd.f32 %v468, %v496
  %v498 = vpop.f32.mrf.mxu0
  %v499 = vadd.f32 %v470, %v498
  %500 = vdwg.mxu0
  %501 = vmatpush.bf16.msra.mxu0 %v381
  %502 = vmatpush.bf16.msra.mxu0 %v380
  %503 = vmatpush.bf16.msra.mxu0 %v379
  %504 = vmatpush.bf16.msra.mxu0 %v378
  %505 = vmatpush.bf16.msra.mxu0 %v377
  %506 = vmatpush.bf16.msra.mxu0 %v376
  %507 = vmatpush.bf16.msra.mxu0 %v375
  %508 = vmatpush.bf16.msra.mxu0 %v374
  %509 = vmatmul.bf16.gmra.mxu0 %v193
  %v510 = vpop.f32.mrf.mxu0
  %v511 = vadd.f32 %v482, %v510
  %v512 = vpop.f32.mrf.mxu0
  %v513 = vadd.f32 %v484, %v512
  %514 = vmatmul.bf16.gmra.mxu0 %v197
  %v515 = vpop.f32.mrf.mxu0
  %v516 = vadd.f32 %v487, %v515
  %v517 = vpop.f32.mrf.mxu0
  %v518 = vadd.f32 %v489, %v517
  %519 = vmatmul.bf16.gmra.mxu0 %v201
  %v520 = vpop.f32.mrf.mxu0
  %v521 = vadd.f32 %v492, %v520
  %v522 = vpop.f32.mrf.mxu0
  %v523 = vadd.f32 %v494, %v522
  %524 = vmatmul.bf16.gmra.mxu0 %v205
  %v525 = vpop.f32.mrf.mxu0
  %v526 = vadd.f32 %v497, %v525
  %v527 = vpop.f32.mrf.mxu0
  %v528 = vadd.f32 %v499, %v527
  %529 = vdwg.mxu0
  %v530 = vmax.f32 %v511, 0.0
  %v531 = vmax.f32 %v513, 0.0
  %v532 = vmax.f32 %v516, 0.0
  %v533 = vmax.f32 %v518, 0.0
  %v534 = vmax.f32 %v521, 0.0
  %v535 = vmax.f32 %v523, 0.0
  %v536 = vmax.f32 %v526, 0.0
  %v537 = vmax.f32 %v528, 0.0
  %v538 = vpack.c.bf16 %v530, %v530
  %v539 = vpack.c.bf16 %v531, %v531
  %v540 = vpack.c.bf16 %v532, %v532
  %v541 = vpack.c.bf16 %v533, %v533
  %v542 = vpack.c.bf16 %v534, %v534
  %v543 = vpack.c.bf16 %v535, %v535
  %v544 = vpack.c.bf16 %v536, %v536
  %v545 = vpack.c.bf16 %v537, %v537
  %546 = vst [vmem:[%s3] sm:$0xf] %v538
  %547 = vst [vmem:[%s3 + $0x4] sm:$0xf] %v539
  %548 = vst [vmem:[%s3 + $0x8] sm:$0xf] %v540
  %549 = vst [vmem:[%s3 + $0xc] sm:$0xf] %v541
  %550 = vst [vmem:[%s3 + $0x10] sm:$0xf] %v542
  %551 = vst [vmem:[%s3 + $0x14] sm:$0xf] %v543
  %552 = vst [vmem:[%s3 + $0x18] sm:$0xf] %v544
  %553 = vst [vmem:[%s3 + $0x1c] sm:$0xf] %v545
  // Predicated region
  $region14: #{actor_forward.5} parent=0 // pred_check
    _
  $region15: #{actor_forward.5} parent=0 // pred_check_branch
    %555 = sbr.rel (0) target = $region17
  $region16: #{actor_forward.5} parent=0 // pred_region
    _
  $region17: #{actor_forward.5} parent=0 // pred_fallthru
    _
  // Predicated region
  $region18: #{actor_forward.5} parent=0 // pred_check
    _
  $region19: #{actor_forward.5} parent=0 // pred_check_branch
    %557 = sbr.rel (0) target = $region21
  $region20: #{actor_forward.5} parent=0 // pred_region
    _
  $region21: #{actor_forward.5} parent=0 // pred_fallthru
    _

// kernel: actor_forward.6
$region0: #{actor_forward.6}
  #allocation0 [shape = 'u32[]', space=smem, size = 0x4, offset = 0x4, fixed_abs, tag = 'smem constant byte address 0x4 - core index']
  #allocation1 [shape = 'u32[72,128]{1,0:T(1,128)}', space=vmem, size = 0x9000, scoped, tag = 'internal scratch']
  %s0 = inlined_call_operand.vmem [shape: bf16[64,576], index: 0, kind: input, shape index: {}]
  %s1 = inlined_call_operand.vmem [shape: bf16[576,128], index: 1, kind: input, shape index: {}]
  %s2 = inlined_call_operand.vmem [shape: f32[64,1], index: 2, kind: input, shape index: {}]
  %s3 = inlined_call_operand.vmem [shape: bf16[64,128], index: 3, kind: output, shape index: {}]
  %s4 = sld [smem:[#allocation0]]
  $region22: #{actor_forward.6} parent=0
    _
  %s6 = ssub.s32 1, %s4
  %s7 = scalar_select 0, %s6, %s4
  // Predicated region
  $region2: #{actor_forward.6} parent=0 // pred_check
    _
  $region3: #{actor_forward.6} parent=0 // pred_check_branch
    %9 = sbr.rel (0) target = $region5
  $region4: #{actor_forward.6} parent=0 // pred_region
    _
  $region5: #{actor_forward.6} parent=0 // pred_fallthru
    _
  // Predicated region
  $region6: #{actor_forward.6} parent=0 // pred_check
    _
  $region7: #{actor_forward.6} parent=0 // pred_check_branch
    %11 = sbr.rel (0) target = $region9
  $region8: #{actor_forward.6} parent=0 // pred_region
    _
  $region9: #{actor_forward.6} parent=0 // pred_fallthru
    _
  // Predicated region
  $region10: #{actor_forward.6} parent=0 // pred_check
    _
  $region11: #{actor_forward.6} parent=0 // pred_check_branch
    %13 = sbr.rel (0) target = $region13
  $region12: #{actor_forward.6} parent=0 // pred_region
    _
  $region13: #{actor_forward.6} parent=0 // pred_fallthru
    _
  %v15 = vld [vmem:[%s0] sm:$0xff]
  %v16 = vld [vmem:[%s0 + $0x8] sm:$0xff]
  %v17 = vld [vmem:[%s0 + $0x10] sm:$0xf]
  %v18 = vld [vmem:[%s0 + $0x14] sm:$0xff]
  %v19 = vld [vmem:[%s0 + $0x1c] sm:$0xff]
  %v20 = vld [vmem:[%s0 + $0x24] sm:$0xf]
  %v21 = vld [vmem:[%s0 + $0x28] sm:$0xff]
  %v22 = vld [vmem:[%s0 + $0x30] sm:$0xff]
  %v23 = vld [vmem:[%s0 + $0x38] sm:$0xf]
  %v24 = vld [vmem:[%s0 + $0x3c] sm:$0xff]
  %v25 = vld [vmem:[%s0 + $0x44] sm:$0xff]
  %v26 = vld [vmem:[%s0 + $0x4c] sm:$0xf]
  %v27 = vld [vmem:[%s0 + $0x50] sm:$0xff]
  %v28 = vld [vmem:[%s0 + $0x58] sm:$0xff]
  %v29 = vld [vmem:[%s0 + $0x60] sm:$0xf]
  %v30 = vld [vmem:[%s0 + $0x64] sm:$0xff]
  %v31 = vld [vmem:[%s0 + $0x6c] sm:$0xff]
  %v32 = vld [vmem:[%s0 + $0x74] sm:$0xf]
  %v33 = vld [vmem:[%s0 + $0x78] sm:$0xff]
  %v34 = vld [vmem:[%s0 + $0x80] sm:$0xff]
  %v35 = vld [vmem:[%s0 + $0x88] sm:$0xf]
  %v36 = vld [vmem:[%s0 + $0x8c] sm:$0xff]
  %v37 = vld [vmem:[%s0 + $0x94] sm:$0xff]
  %v38 = vld [vmem:[%s0 + $0x9c] sm:$0xf]
  %v39 = vld [vmem:[%s1] sm:$0xf]
  %v40 = vld [vmem:[%s1 + $0x4] sm:$0xf]
  %v41 = vld [vmem:[%s1 + $0x8] sm:$0xf]
  %v42 = vld [vmem:[%s1 + $0xc] sm:$0xf]
  %v43 = vld [vmem:[%s1 + $0x10] sm:$0xf]
  %v44 = vld [vmem:[%s1 + $0x14] sm:$0xf]
  %v45 = vld [vmem:[%s1 + $0x18] sm:$0xf]
  %v46 = vld [vmem:[%s1 + $0x1c] sm:$0xf]
  %v47 = vld [vmem:[%s1 + $0x20] sm:$0xf]
  %v48 = vld [vmem:[%s1 + $0x24] sm:$0xf]
  %v49 = vld [vmem:[%s1 + $0x28] sm:$0xf]
  %v50 = vld [vmem:[%s1 + $0x2c] sm:$0xf]
  %v51 = vld [vmem:[%s1 + $0x30] sm:$0xf]
  %v52 = vld [vmem:[%s1 + $0x34] sm:$0xf]
  %v53 = vld [vmem:[%s1 + $0x38] sm:$0xf]
  %v54 = vld [vmem:[%s1 + $0x3c] sm:$0xf]
  %v55 = vld [vmem:[%s1 + $0x40] sm:$0xf]
  %v56 = vld [vmem:[%s1 + $0x44] sm:$0xf]
  %v57 = vld [vmem:[%s1 + $0x48] sm:$0xf]
  %v58 = vld [vmem:[%s1 + $0x4c] sm:$0xf]
  %v59 = vld [vmem:[%s1 + $0x50] sm:$0xf]
  %v60 = vld [vmem:[%s1 + $0x54] sm:$0xf]
  %v61 = vld [vmem:[%s1 + $0x58] sm:$0xf]
  %v62 = vld [vmem:[%s1 + $0x5c] sm:$0xf]
  %v63 = vld [vmem:[%s1 + $0x60] sm:$0xf]
  %v64 = vld [vmem:[%s1 + $0x64] sm:$0xf]
  %v65 = vld [vmem:[%s1 + $0x68] sm:$0xf]
  %v66 = vld [vmem:[%s1 + $0x6c] sm:$0xf]
  %v67 = vld [vmem:[%s1 + $0x70] sm:$0xf]
  %v68 = vld [vmem:[%s1 + $0x74] sm:$0xf]
  %v69 = vld [vmem:[%s1 + $0x78] sm:$0xf]
  %v70 = vld [vmem:[%s1 + $0x7c] sm:$0xf]
  %v71 = vld [vmem:[%s1 + $0x80] sm:$0xf]
  %v72 = vld [vmem:[%s1 + $0x84] sm:$0xf]
  %v73 = vld [vmem:[%s1 + $0x88] sm:$0xf]
  %v74 = vld [vmem:[%s1 + $0x8c] sm:$0xf]
  %v75 = vld [vmem:[%s1 + $0x90] sm:$0xf]
  %v76 = vld [vmem:[%s1 + $0x94] sm:$0xf]
  %v77 = vld [vmem:[%s1 + $0x98] sm:$0xf]
  %v78 = vld [vmem:[%s1 + $0x9c] sm:$0xf]
  %v79 = vld [vmem:[%s1 + $0xa0] sm:$0xf]
  %v80 = vld [vmem:[%s1 + $0xa4] sm:$0xf]
  %v81 = vld [vmem:[%s1 + $0xa8] sm:$0xf]
  %v82 = vld [vmem:[%s1 + $0xac] sm:$0xf]
  %v83 = vld [vmem:[%s1 + $0xb0] sm:$0xf]
  %v84 = vld [vmem:[%s1 + $0xb4] sm:$0xf]
  %v85 = vld [vmem:[%s1 + $0xb8] sm:$0xf]
  %v86 = vld [vmem:[%s1 + $0xbc] sm:$0xf]
  %v87 = vld [vmem:[%s1 + $0xc0] sm:$0xf]
  %v88 = vld [vmem:[%s1 + $0xc4] sm:$0xf]
  %v89 = vld [vmem:[%s1 + $0xc8] sm:$0xf]
  %v90 = vld [vmem:[%s1 + $0xcc] sm:$0xf]
  %v91 = vld [vmem:[%s1 + $0xd0] sm:$0xf]
  %v92 = vld [vmem:[%s1 + $0xd4] sm:$0xf]
  %v93 = vld [vmem:[%s1 + $0xd8] sm:$0xf]
  %v94 = vld [vmem:[%s1 + $0xdc] sm:$0xf]
  %v95 = vld [vmem:[%s1 + $0xe0] sm:$0xf]
  %v96 = vld [vmem:[%s1 + $0xe4] sm:$0xf]
  %v97 = vld [vmem:[%s1 + $0xe8] sm:$0xf]
  %v98 = vld [vmem:[%s1 + $0xec] sm:$0xf]
  %v99 = vld [vmem:[%s1 + $0xf0] sm:$0xf]
  %v100 = vld [vmem:[%s1 + $0xf4] sm:$0xf]
  %v101 = vld [vmem:[%s1 + $0xf8] sm:$0xf]
  %v102 = vld [vmem:[%s1 + $0xfc] sm:$0xf]
  %v103 = vld [vmem:[%s1 + $0x100] sm:$0xf]
  %v104 = vld [vmem:[%s1 + $0x104] sm:$0xf]
  %v105 = vld [vmem:[%s1 + $0x108] sm:$0xf]
  %v106 = vld [vmem:[%s1 + $0x10c] sm:$0xf]
  %v107 = vld [vmem:[%s1 + $0x110] sm:$0xf]
  %v108 = vld [vmem:[%s1 + $0x114] sm:$0xf]
  %v109 = vld [vmem:[%s1 + $0x118] sm:$0xf]
  %v110 = vld [vmem:[%s1 + $0x11c] sm:$0xf]
  %v111 = vld [vmem:[%s2] sm:$0xff]
  %v112 = vld [vmem:[%s2 + $0x8] sm:$0xff]
  %v113 = vld [vmem:[%s2 + $0x10] sm:$0xff]
  %v114 = vld [vmem:[%s2 + $0x18] sm:$0xff]
  %v115 = vld [vmem:[%s2 + $0x20] sm:$0xff]
  %v116 = vld [vmem:[%s2 + $0x28] sm:$0xff]
  %v117 = vld [vmem:[%s2 + $0x30] sm:$0xff]
  %v118 = vld [vmem:[%s2 + $0x38] sm:$0xff]
  %120 = vset.pattern.permute.xlu0 0
  %121 = vperm.xlu0 %120, %v111
  %v122 = vpop.permute.xlu0 %121
  %125 = vset.pattern.permute.xlu0 0
  %126 = vperm.xlu0 %125, %v112
  %v127 = vpop.permute.xlu0 %126
  %130 = vset.pattern.permute.xlu0 0
  %131 = vperm.xlu0 %130, %v113
  %v132 = vpop.permute.xlu0 %131
  %135 = vset.pattern.permute.xlu0 0
  %136 = vperm.xlu0 %135, %v114
  %v137 = vpop.permute.xlu0 %136
  %140 = vset.pattern.permute.xlu0 0
  %141 = vperm.xlu0 %140, %v115
  %v142 = vpop.permute.xlu0 %141
  %145 = vset.pattern.permute.xlu0 0
  %146 = vperm.xlu0 %145, %v116
  %v147 = vpop.permute.xlu0 %146
  %150 = vset.pattern.permute.xlu0 0
  %151 = vperm.xlu0 %150, %v117
  %v152 = vpop.permute.xlu0 %151
  %155 = vset.pattern.permute.xlu0 0
  %156 = vperm.xlu0 %155, %v118
  %v157 = vpop.permute.xlu0 %156
  %v183 = vunpack.c.l.b16 %v15
  %v184 = vunpack.c.h.b16 %v15
  %v185 = vunpack.c.l.b16 %v16
  %v186 = vunpack.c.h.b16 %v16
  %v187 = vunpack.c.l.b16 %v17
  %v188 = vunpack.c.l.b16 %v18
  %v189 = vunpack.c.h.b16 %v18
  %v190 = vunpack.c.l.b16 %v19
  %v191 = vunpack.c.h.b16 %v19
  %v192 = vunpack.c.l.b16 %v20
  %v193 = vunpack.c.l.b16 %v21
  %v194 = vunpack.c.h.b16 %v21
  %v195 = vunpack.c.l.b16 %v22
  %v196 = vunpack.c.h.b16 %v22
  %v197 = vunpack.c.l.b16 %v23
  %v198 = vunpack.c.l.b16 %v24
  %v199 = vunpack.c.h.b16 %v24
  %v200 = vunpack.c.l.b16 %v25
  %v201 = vunpack.c.h.b16 %v25
  %v202 = vunpack.c.l.b16 %v26
  %v203 = vunpack.c.l.b16 %v27
  %v204 = vunpack.c.h.b16 %v27
  %v205 = vunpack.c.l.b16 %v28
  %v206 = vunpack.c.h.b16 %v28
  %v207 = vunpack.c.l.b16 %v29
  %v208 = vunpack.c.l.b16 %v30
  %v209 = vunpack.c.h.b16 %v30
  %v210 = vunpack.c.l.b16 %v31
  %v211 = vunpack.c.h.b16 %v31
  %v212 = vunpack.c.l.b16 %v32
  %v213 = vunpack.c.l.b16 %v33
  %v214 = vunpack.c.h.b16 %v33
  %v215 = vunpack.c.l.b16 %v34
  %v216 = vunpack.c.h.b16 %v34
  %v217 = vunpack.c.l.b16 %v35
  %v218 = vunpack.c.l.b16 %v36
  %v219 = vunpack.c.h.b16 %v36
  %v220 = vunpack.c.l.b16 %v37
  %v221 = vunpack.c.h.b16 %v37
  %v222 = vunpack.c.l.b16 %v38
  %v223 = vpack.c.b16 %v188, %v183
  %v224 = vpack.c.b16 %v189, %v184
  %v225 = vpack.c.b16 %v190, %v185
  %v226 = vpack.c.b16 %v191, %v186
  %v227 = vpack.c.b16 %v192, %v187
  %v228 = vpack.c.b16 %v198, %v193
  %v229 = vpack.c.b16 %v199, %v194
  %v230 = vpack.c.b16 %v200, %v195
  %v231 = vpack.c.b16 %v201, %v196
  %v232 = vpack.c.b16 %v202, %v197
  %v233 = vpack.c.b16 %v208, %v203
  %v234 = vpack.c.b16 %v209, %v204
  %v235 = vpack.c.b16 %v210, %v205
  %v236 = vpack.c.b16 %v211, %v206
  %v237 = vpack.c.b16 %v212, %v207
  %v238 = vpack.c.b16 %v218, %v213
  %v239 = vpack.c.b16 %v219, %v214
  %v240 = vpack.c.b16 %v220, %v215
  %v241 = vpack.c.b16 %v221, %v216
  %v242 = vpack.c.b16 %v222, %v217
  %v331 = vunpack.c.l.b16 %v39
  %v332 = vunpack.c.l.b16 %v40
  %v333 = vunpack.c.l.b16 %v41
  %v334 = vunpack.c.l.b16 %v42
  %v335 = vunpack.c.l.b16 %v43
  %v336 = vunpack.c.l.b16 %v44
  %v337 = vunpack.c.l.b16 %v45
  %v338 = vunpack.c.l.b16 %v46
  %v339 = vunpack.c.l.b16 %v47
  %v340 = vunpack.c.l.b16 %v48
  %v341 = vunpack.c.l.b16 %v49
  %v342 = vunpack.c.l.b16 %v50
  %v343 = vunpack.c.l.b16 %v51
  %v344 = vunpack.c.l.b16 %v52
  %v345 = vunpack.c.l.b16 %v53
  %v346 = vunpack.c.l.b16 %v54
  %v347 = vunpack.c.l.b16 %v55
  %v348 = vunpack.c.l.b16 %v56
  %v349 = vunpack.c.l.b16 %v57
  %v350 = vunpack.c.l.b16 %v58
  %v351 = vunpack.c.l.b16 %v59
  %v352 = vunpack.c.l.b16 %v60
  %v353 = vunpack.c.l.b16 %v61
  %v354 = vunpack.c.l.b16 %v62
  %v355 = vunpack.c.l.b16 %v63
  %v356 = vunpack.c.l.b16 %v64
  %v357 = vunpack.c.l.b16 %v65
  %v358 = vunpack.c.l.b16 %v66
  %v359 = vunpack.c.l.b16 %v67
  %v360 = vunpack.c.l.b16 %v68
  %v361 = vunpack.c.l.b16 %v69
  %v362 = vunpack.c.l.b16 %v70
  %v363 = vunpack.c.l.b16 %v71
  %v364 = vunpack.c.l.b16 %v72
  %v365 = vunpack.c.l.b16 %v73
  %v366 = vunpack.c.l.b16 %v74
  %v367 = vunpack.c.l.b16 %v75
  %v368 = vunpack.c.l.b16 %v76
  %v369 = vunpack.c.l.b16 %v77
  %v370 = vunpack.c.l.b16 %v78
  %v371 = vunpack.c.l.b16 %v79
  %v372 = vunpack.c.l.b16 %v80
  %v373 = vunpack.c.l.b16 %v81
  %v374 = vunpack.c.l.b16 %v82
  %v375 = vunpack.c.l.b16 %v83
  %v376 = vunpack.c.l.b16 %v84
  %v377 = vunpack.c.l.b16 %v85
  %v378 = vunpack.c.l.b16 %v86
  %v379 = vunpack.c.l.b16 %v87
  %v380 = vunpack.c.l.b16 %v88
  %v381 = vunpack.c.l.b16 %v89
  %v382 = vunpack.c.l.b16 %v90
  %v383 = vunpack.c.l.b16 %v91
  %v384 = vunpack.c.l.b16 %v92
  %v385 = vunpack.c.l.b16 %v93
  %v386 = vunpack.c.l.b16 %v94
  %v387 = vunpack.c.l.b16 %v95
  %v388 = vunpack.c.l.b16 %v96
  %v389 = vunpack.c.l.b16 %v97
  %v390 = vunpack.c.l.b16 %v98
  %v391 = vunpack.c.l.b16 %v99
  %v392 = vunpack.c.l.b16 %v100
  %v393 = vunpack.c.l.b16 %v101
  %v394 = vunpack.c.l.b16 %v102
  %v395 = vunpack.c.l.b16 %v103
  %v396 = vunpack.c.l.b16 %v104
  %v397 = vunpack.c.l.b16 %v105
  %v398 = vunpack.c.l.b16 %v106
  %v399 = vunpack.c.l.b16 %v107
  %v400 = vunpack.c.l.b16 %v108
  %v401 = vunpack.c.l.b16 %v109
  %v402 = vunpack.c.l.b16 %v110
  %v403 = vpack.c.b16 %v332, %v331
  %v404 = vpack.c.b16 %v334, %v333
  %v405 = vpack.c.b16 %v336, %v335
  %v406 = vpack.c.b16 %v338, %v337
  %v407 = vpack.c.b16 %v340, %v339
  %v408 = vpack.c.b16 %v342, %v341
  %v409 = vpack.c.b16 %v344, %v343
  %v410 = vpack.c.b16 %v346, %v345
  %v411 = vpack.c.b16 %v348, %v347
  %v412 = vpack.c.b16 %v350, %v349
  %v413 = vpack.c.b16 %v352, %v351
  %v414 = vpack.c.b16 %v354, %v353
  %v415 = vpack.c.b16 %v356, %v355
  %v416 = vpack.c.b16 %v358, %v357
  %v417 = vpack.c.b16 %v360, %v359
  %v418 = vpack.c.b16 %v362, %v361
  %v419 = vpack.c.b16 %v364, %v363
  %v420 = vpack.c.b16 %v366, %v365
  %v421 = vpack.c.b16 %v368, %v367
  %v422 = vpack.c.b16 %v370, %v369
  %v423 = vpack.c.b16 %v372, %v371
  %v424 = vpack.c.b16 %v374, %v373
  %v425 = vpack.c.b16 %v376, %v375
  %v426 = vpack.c.b16 %v378, %v377
  %v427 = vpack.c.b16 %v380, %v379
  %v428 = vpack.c.b16 %v382, %v381
  %v429 = vpack.c.b16 %v384, %v383
  %v430 = vpack.c.b16 %v386, %v385
  %v431 = vpack.c.b16 %v388, %v387
  %v432 = vpack.c.b16 %v390, %v389
  %v433 = vpack.c.b16 %v392, %v391
  %v434 = vpack.c.b16 %v394, %v393
  %v435 = vpack.c.b16 %v396, %v395
  %v436 = vpack.c.b16 %v398, %v397
  %v437 = vpack.c.b16 %v400, %v399
  %v438 = vpack.c.b16 %v402, %v401
  %vm475 = vcmask 523264
  %v477 = vsel %vm475, %v227, 0
  %v480 = vsel %vm475, %v232, 0
  %v483 = vsel %vm475, %v237, 0
  %v486 = vsel %vm475, %v242, 0
  %488 = vmatpush.bf16.msra.mxu0 %v410
  %489 = vmatpush.bf16.msra.mxu0 %v409
  %490 = vmatpush.bf16.msra.mxu0 %v408
  %491 = vmatpush.bf16.msra.mxu0 %v407
  %492 = vmatpush.bf16.msra.mxu0 %v406
  %493 = vmatpush.bf16.msra.mxu0 %v405
  %494 = vmatpush.bf16.msra.mxu0 %v404
  %495 = vmatpush.bf16.msra.mxu0 %v403
  %496 = vmatmul.bf16.gmra.mxu0 %v223
  %v497 = vpop.f32.mrf.mxu0
  %v498 = vadd.f32 %v122, %v497
  %v499 = vpop.f32.mrf.mxu0
  %v500 = vadd.f32 %v127, %v499
  %501 = vmatmul.bf16.gmra.mxu0 %v228
  %v502 = vpop.f32.mrf.mxu0
  %v503 = vadd.f32 %v132, %v502
  %v504 = vpop.f32.mrf.mxu0
  %v505 = vadd.f32 %v137, %v504
  %506 = vmatmul.bf16.gmra.mxu0 %v233
  %v507 = vpop.f32.mrf.mxu0
  %v508 = vadd.f32 %v142, %v507
  %v509 = vpop.f32.mrf.mxu0
  %v510 = vadd.f32 %v147, %v509
  %511 = vmatmul.bf16.gmra.mxu0 %v238
  %v512 = vpop.f32.mrf.mxu0
  %v513 = vadd.f32 %v152, %v512
  %v514 = vpop.f32.mrf.mxu0
  %v515 = vadd.f32 %v157, %v514
  %516 = vdwg.mxu0
  %517 = vmatpush.bf16.msra.mxu0 %v418
  %518 = vmatpush.bf16.msra.mxu0 %v417
  %519 = vmatpush.bf16.msra.mxu0 %v416
  %520 = vmatpush.bf16.msra.mxu0 %v415
  %521 = vmatpush.bf16.msra.mxu0 %v414
  %522 = vmatpush.bf16.msra.mxu0 %v413
  %523 = vmatpush.bf16.msra.mxu0 %v412
  %524 = vmatpush.bf16.msra.mxu0 %v411
  %525 = vmatmul.bf16.gmra.mxu0 %v224
  %v526 = vpop.f32.mrf.mxu0
  %v527 = vadd.f32 %v498, %v526
  %v528 = vpop.f32.mrf.mxu0
  %v529 = vadd.f32 %v500, %v528
  %530 = vmatmul.bf16.gmra.mxu0 %v229
  %v531 = vpop.f32.mrf.mxu0
  %v532 = vadd.f32 %v503, %v531
  %v533 = vpop.f32.mrf.mxu0
  %v534 = vadd.f32 %v505, %v533
  %535 = vmatmul.bf16.gmra.mxu0 %v234
  %v536 = vpop.f32.mrf.mxu0
  %v537 = vadd.f32 %v508, %v536
  %v538 = vpop.f32.mrf.mxu0
  %v539 = vadd.f32 %v510, %v538
  %540 = vmatmul.bf16.gmra.mxu0 %v239
  %v541 = vpop.f32.mrf.mxu0
  %v542 = vadd.f32 %v513, %v541
  %v543 = vpop.f32.mrf.mxu0
  %v544 = vadd.f32 %v515, %v543
  %545 = vdwg.mxu0
  %546 = vmatpush.bf16.msra.mxu0 %v426
  %547 = vmatpush.bf16.msra.mxu0 %v425
  %548 = vmatpush.bf16.msra.mxu0 %v424
  %549 = vmatpush.bf16.msra.mxu0 %v423
  %550 = vmatpush.bf16.msra.mxu0 %v422
  %551 = vmatpush.bf16.msra.mxu0 %v421
  %552 = vmatpush.bf16.msra.mxu0 %v420
  %553 = vmatpush.bf16.msra.mxu0 %v419
  %554 = vmatmul.bf16.gmra.mxu0 %v225
  %v555 = vpop.f32.mrf.mxu0
  %v556 = vadd.f32 %v527, %v555
  %v557 = vpop.f32.mrf.mxu0
  %v558 = vadd.f32 %v529, %v557
  %559 = vmatmul.bf16.gmra.mxu0 %v230
  %v560 = vpop.f32.mrf.mxu0
  %v561 = vadd.f32 %v532, %v560
  %v562 = vpop.f32.mrf.mxu0
  %v563 = vadd.f32 %v534, %v562
  %564 = vmatmul.bf16.gmra.mxu0 %v235
  %v565 = vpop.f32.mrf.mxu0
  %v566 = vadd.f32 %v537, %v565
  %v567 = vpop.f32.mrf.mxu0
  %v568 = vadd.f32 %v539, %v567
  %569 = vmatmul.bf16.gmra.mxu0 %v240
  %v570 = vpop.f32.mrf.mxu0
  %v571 = vadd.f32 %v542, %v570
  %v572 = vpop.f32.mrf.mxu0
  %v573 = vadd.f32 %v544, %v572
  %574 = vdwg.mxu0
  %575 = vmatpush.bf16.msra.mxu0 %v434
  %576 = vmatpush.bf16.msra.mxu0 %v433
  %577 = vmatpush.bf16.msra.mxu0 %v432
  %578 = vmatpush.bf16.msra.mxu0 %v431
  %579 = vmatpush.bf16.msra.mxu0 %v430
  %580 = vmatpush.bf16.msra.mxu0 %v429
  %581 = vmatpush.bf16.msra.mxu0 %v428
  %582 = vmatpush.bf16.msra.mxu0 %v427
  %583 = vmatmul.bf16.gmra.mxu0 %v226
  %v584 = vpop.f32.mrf.mxu0
  %v585 = vadd.f32 %v556, %v584
  %v586 = vpop.f32.mrf.mxu0
  %v587 = vadd.f32 %v558, %v586
  %588 = vmatmul.bf16.gmra.mxu0 %v231
  %v589 = vpop.f32.mrf.mxu0
  %v590 = vadd.f32 %v561, %v589
  %v591 = vpop.f32.mrf.mxu0
  %v592 = vadd.f32 %v563, %v591
  %593 = vmatmul.bf16.gmra.mxu0 %v236
  %v594 = vpop.f32.mrf.mxu0
  %v595 = vadd.f32 %v566, %v594
  %v596 = vpop.f32.mrf.mxu0
  %v597 = vadd.f32 %v568, %v596
  %598 = vmatmul.bf16.gmra.mxu0 %v241
  %v599 = vpop.f32.mrf.mxu0
  %v600 = vadd.f32 %v571, %v599
  %v601 = vpop.f32.mrf.mxu0
  %v602 = vadd.f32 %v573, %v601
  %603 = vdwg.mxu0
  %604 = vmatpush.bf16.msra.mxu0 0
  %605 = vmatpush.bf16.msra.mxu0 0
  %606 = vmatpush.bf16.msra.mxu0 0
  %607 = vmatpush.bf16.msra.mxu0 0
  %608 = vmatpush.bf16.msra.mxu0 %v438
  %609 = vmatpush.bf16.msra.mxu0 %v437
  %610 = vmatpush.bf16.msra.mxu0 %v436
  %611 = vmatpush.bf16.msra.mxu0 %v435
  %612 = vmatmul.bf16.gmra.mxu0 %v477
  %v613 = vpop.f32.mrf.mxu0
  %v614 = vadd.f32 %v585, %v613
  %v615 = vpop.f32.mrf.mxu0
  %v616 = vadd.f32 %v587, %v615
  %617 = vmatmul.bf16.gmra.mxu0 %v480
  %v618 = vpop.f32.mrf.mxu0
  %v619 = vadd.f32 %v590, %v618
  %v620 = vpop.f32.mrf.mxu0
  %v621 = vadd.f32 %v592, %v620
  %622 = vmatmul.bf16.gmra.mxu0 %v483
  %v623 = vpop.f32.mrf.mxu0
  %v624 = vadd.f32 %v595, %v623
  %v625 = vpop.f32.mrf.mxu0
  %v626 = vadd.f32 %v597, %v625
  %627 = vmatmul.bf16.gmra.mxu0 %v486
  %v628 = vpop.f32.mrf.mxu0
  %v629 = vadd.f32 %v600, %v628
  %v630 = vpop.f32.mrf.mxu0
  %v631 = vadd.f32 %v602, %v630
  %632 = vdwg.mxu0
  %v633 = vmax.f32 %v614, 0.0
  %v634 = vmax.f32 %v616, 0.0
  %v635 = vmax.f32 %v619, 0.0
  %v636 = vmax.f32 %v621, 0.0
  %v637 = vmax.f32 %v624, 0.0
  %v638 = vmax.f32 %v626, 0.0
  %v639 = vmax.f32 %v629, 0.0
  %v640 = vmax.f32 %v631, 0.0
  %v641 = vpack.c.bf16 %v633, %v633
  %v642 = vpack.c.bf16 %v634, %v634
  %v643 = vpack.c.bf16 %v635, %v635
  %v644 = vpack.c.bf16 %v636, %v636
  %v645 = vpack.c.bf16 %v637, %v637
  %v646 = vpack.c.bf16 %v638, %v638
  %v647 = vpack.c.bf16 %v639, %v639
  %v648 = vpack.c.bf16 %v640, %v640
  %649 = vst [vmem:[%s3] sm:$0xf] %v641
  %650 = vst [vmem:[%s3 + $0x4] sm:$0xf] %v642
  %651 = vst [vmem:[%s3 + $0x8] sm:$0xf] %v643
  %652 = vst [vmem:[%s3 + $0xc] sm:$0xf] %v644
  %653 = vst [vmem:[%s3 + $0x10] sm:$0xf] %v645
  %654 = vst [vmem:[%s3 + $0x14] sm:$0xf] %v646
  %655 = vst [vmem:[%s3 + $0x18] sm:$0xf] %v647
  %656 = vst [vmem:[%s3 + $0x1c] sm:$0xf] %v648
  // Predicated region
  $region14: #{actor_forward.6} parent=0 // pred_check
    _
  $region15: #{actor_forward.6} parent=0 // pred_check_branch
    %658 = sbr.rel (0) target = $region17
  $region16: #{actor_forward.6} parent=0 // pred_region
    _
  $region17: #{actor_forward.6} parent=0 // pred_fallthru
    _
  // Predicated region
  $region18: #{actor_forward.6} parent=0 // pred_check
    _
  $region19: #{actor_forward.6} parent=0 // pred_check_branch
    %660 = sbr.rel (0) target = $region21
  $region20: #{actor_forward.6} parent=0 // pred_region
    _
  $region21: #{actor_forward.6} parent=0 // pred_fallthru
    _

// kernel: actor_forward.7
$region0: #{actor_forward.7}
  #allocation0 [shape = 'u32[]', space=smem, size = 0x4, offset = 0x4, fixed_abs, tag = 'smem constant byte address 0x4 - core index']
  #allocation1 [shape = 'u32[72,128]{1,0:T(1,128)}', space=vmem, size = 0x9000, scoped, tag = 'internal scratch']
  %s0 = inlined_call_operand.vmem [shape: bf16[64,128], index: 0, kind: input, shape index: {}]
  %s1 = inlined_call_operand.vmem [shape: bf16[512,64], index: 1, kind: input, shape index: {}]
  %s2 = inlined_call_operand.vmem [shape: f32[512,1], index: 2, kind: input, shape index: {}]
  %s3 = inlined_call_operand.vmem [shape: bf16[6,512], index: 3, kind: input, shape index: {}]
  %s4 = inlined_call_operand.vmem [shape: f32[6,1], index: 4, kind: input, shape index: {}]
  %s5 = inlined_call_operand.vmem [shape: f32[6,128], index: 5, kind: output, shape index: {}]
  %s6 = sld [smem:[#allocation0]]
  $region30: #{actor_forward.7} parent=0
    _
  %s8 = ssub.s32 1, %s6
  %s9 = scalar_select 0, %s8, %s6
  // Predicated region
  $region2: #{actor_forward.7} parent=0 // pred_check
    _
  $region3: #{actor_forward.7} parent=0 // pred_check_branch
    %11 = sbr.rel (0) target = $region5
  $region4: #{actor_forward.7} parent=0 // pred_region
    _
  $region5: #{actor_forward.7} parent=0 // pred_fallthru
    _
  // Predicated region
  $region6: #{actor_forward.7} parent=0 // pred_check
    _
  $region7: #{actor_forward.7} parent=0 // pred_check_branch
    %13 = sbr.rel (0) target = $region9
  $region8: #{actor_forward.7} parent=0 // pred_region
    _
  $region9: #{actor_forward.7} parent=0 // pred_fallthru
    _
  // Predicated region
  $region10: #{actor_forward.7} parent=0 // pred_check
    _
  $region11: #{actor_forward.7} parent=0 // pred_check_branch
    %15 = sbr.rel (0) target = $region13
  $region12: #{actor_forward.7} parent=0 // pred_region
    _
  $region13: #{actor_forward.7} parent=0 // pred_fallthru
    _
  // Predicated region
  $region14: #{actor_forward.7} parent=0 // pred_check
    _
  $region15: #{actor_forward.7} parent=0 // pred_check_branch
    %17 = sbr.rel (0) target = $region17
  $region16: #{actor_forward.7} parent=0 // pred_region
    _
  $region17: #{actor_forward.7} parent=0 // pred_fallthru
    _
  // Predicated region
  $region18: #{actor_forward.7} parent=0 // pred_check
    _
  $region19: #{actor_forward.7} parent=0 // pred_check_branch
    %19 = sbr.rel (0) target = $region21
  $region20: #{actor_forward.7} parent=0 // pred_region
    _
  $region21: #{actor_forward.7} parent=0 // pred_fallthru
    _
  %v21 = vld [vmem:[%s1] sm:$0xf]
  %v22 = vld [vmem:[%s1 + $0x4] sm:$0xf]
  %v23 = vld [vmem:[%s1 + $0x8] sm:$0xf]
  %v24 = vld [vmem:[%s1 + $0xc] sm:$0xf]
  %v25 = vld [vmem:[%s1 + $0x10] sm:$0xf]
  %v26 = vld [vmem:[%s1 + $0x14] sm:$0xf]
  %v27 = vld [vmem:[%s1 + $0x18] sm:$0xf]
  %v28 = vld [vmem:[%s1 + $0x1c] sm:$0xf]
  %v29 = vld [vmem:[%s1 + $0x20] sm:$0xf]
  %v30 = vld [vmem:[%s1 + $0x24] sm:$0xf]
  %v31 = vld [vmem:[%s1 + $0x28] sm:$0xf]
  %v32 = vld [vmem:[%s1 + $0x2c] sm:$0xf]
  %v33 = vld [vmem:[%s1 + $0x30] sm:$0xf]
  %v34 = vld [vmem:[%s1 + $0x34] sm:$0xf]
  %v35 = vld [vmem:[%s1 + $0x38] sm:$0xf]
  %v36 = vld [vmem:[%s1 + $0x3c] sm:$0xf]
  %v37 = vld [vmem:[%s1 + $0x40] sm:$0xf]
  %v38 = vld [vmem:[%s1 + $0x44] sm:$0xf]
  %v39 = vld [vmem:[%s1 + $0x48] sm:$0xf]
  %v40 = vld [vmem:[%s1 + $0x4c] sm:$0xf]
  %v41 = vld [vmem:[%s1 + $0x50] sm:$0xf]
  %v42 = vld [vmem:[%s1 + $0x54] sm:$0xf]
  %v43 = vld [vmem:[%s1 + $0x58] sm:$0xf]
  %v44 = vld [vmem:[%s1 + $0x5c] sm:$0xf]
  %v45 = vld [vmem:[%s1 + $0x60] sm:$0xf]
  %v46 = vld [vmem:[%s1 + $0x64] sm:$0xf]
  %v47 = vld [vmem:[%s1 + $0x68] sm:$0xf]
  %v48 = vld [vmem:[%s1 + $0x6c] sm:$0xf]
  %v49 = vld [vmem:[%s1 + $0x70] sm:$0xf]
  %v50 = vld [vmem:[%s1 + $0x74] sm:$0xf]
  %v51 = vld [vmem:[%s1 + $0x78] sm:$0xf]
  %v52 = vld [vmem:[%s1 + $0x7c] sm:$0xf]
  %v53 = vld [vmem:[%s1 + $0x80] sm:$0xf]
  %v54 = vld [vmem:[%s1 + $0x84] sm:$0xf]
  %v55 = vld [vmem:[%s1 + $0x88] sm:$0xf]
  %v56 = vld [vmem:[%s1 + $0x8c] sm:$0xf]
  %v57 = vld [vmem:[%s1 + $0x90] sm:$0xf]
  %v58 = vld [vmem:[%s1 + $0x94] sm:$0xf]
  %v59 = vld [vmem:[%s1 + $0x98] sm:$0xf]
  %v60 = vld [vmem:[%s1 + $0x9c] sm:$0xf]
  %v61 = vld [vmem:[%s1 + $0xa0] sm:$0xf]
  %v62 = vld [vmem:[%s1 + $0xa4] sm:$0xf]
  %v63 = vld [vmem:[%s1 + $0xa8] sm:$0xf]
  %v64 = vld [vmem:[%s1 + $0xac] sm:$0xf]
  %v65 = vld [vmem:[%s1 + $0xb0] sm:$0xf]
  %v66 = vld [vmem:[%s1 + $0xb4] sm:$0xf]
  %v67 = vld [vmem:[%s1 + $0xb8] sm:$0xf]
  %v68 = vld [vmem:[%s1 + $0xbc] sm:$0xf]
  %v69 = vld [vmem:[%s1 + $0xc0] sm:$0xf]
  %v70 = vld [vmem:[%s1 + $0xc4] sm:$0xf]
  %v71 = vld [vmem:[%s1 + $0xc8] sm:$0xf]
  %v72 = vld [vmem:[%s1 + $0xcc] sm:$0xf]
  %v73 = vld [vmem:[%s1 + $0xd0] sm:$0xf]
  %v74 = vld [vmem:[%s1 + $0xd4] sm:$0xf]
  %v75 = vld [vmem:[%s1 + $0xd8] sm:$0xf]
  %v76 = vld [vmem:[%s1 + $0xdc] sm:$0xf]
  %v77 = vld [vmem:[%s1 + $0xe0] sm:$0xf]
  %v78 = vld [vmem:[%s1 + $0xe4] sm:$0xf]
  %v79 = vld [vmem:[%s1 + $0xe8] sm:$0xf]
  %v80 = vld [vmem:[%s1 + $0xec] sm:$0xf]
  %v81 = vld [vmem:[%s1 + $0xf0] sm:$0xf]
  %v82 = vld [vmem:[%s1 + $0xf4] sm:$0xf]
  %v83 = vld [vmem:[%s1 + $0xf8] sm:$0xf]
  %v84 = vld [vmem:[%s1 + $0xfc] sm:$0xf]
  %v85 = vld [vmem:[%s0] sm:$0xf]
  %v86 = vld [vmem:[%s0 + $0x4] sm:$0xf]
  %v87 = vld [vmem:[%s0 + $0x8] sm:$0xf]
  %v88 = vld [vmem:[%s0 + $0xc] sm:$0xf]
  %v89 = vld [vmem:[%s0 + $0x10] sm:$0xf]
  %v90 = vld [vmem:[%s0 + $0x14] sm:$0xf]
  %v91 = vld [vmem:[%s0 + $0x18] sm:$0xf]
  %v92 = vld [vmem:[%s0 + $0x1c] sm:$0xf]
  %v93 = vld [vmem:[%s2] sm:$0xff]
  %v94 = vld [vmem:[%s2 + $0x8] sm:$0xff]
  %v95 = vld [vmem:[%s2 + $0x10] sm:$0xff]
  %v96 = vld [vmem:[%s2 + $0x18] sm:$0xff]
  %v97 = vld [vmem:[%s2 + $0x20] sm:$0xff]
  %v98 = vld [vmem:[%s2 + $0x28] sm:$0xff]
  %v99 = vld [vmem:[%s2 + $0x30] sm:$0xff]
  %v100 = vld [vmem:[%s2 + $0x38] sm:$0xff]
  %v101 = vld [vmem:[%s2 + $0x40] sm:$0xff]
  %v102 = vld [vmem:[%s2 + $0x48] sm:$0xff]
  %v103 = vld [vmem:[%s2 + $0x50] sm:$0xff]
  %v104 = vld [vmem:[%s2 + $0x58] sm:$0xff]
  %v105 = vld [vmem:[%s2 + $0x60] sm:$0xff]
  %v106 = vld [vmem:[%s2 + $0x68] sm:$0xff]
  %v107 = vld [vmem:[%s2 + $0x70] sm:$0xff]
  %v108 = vld [vmem:[%s2 + $0x78] sm:$0xff]
  %v109 = vld [vmem:[%s2 + $0x80] sm:$0xff]
  %v110 = vld [vmem:[%s2 + $0x88] sm:$0xff]
  %v111 = vld [vmem:[%s2 + $0x90] sm:$0xff]
  %v112 = vld [vmem:[%s2 + $0x98] sm:$0xff]
  %v113 = vld [vmem:[%s2 + $0xa0] sm:$0xff]
  %v114 = vld [vmem:[%s2 + $0xa8] sm:$0xff]
  %v115 = vld [vmem:[%s2 + $0xb0] sm:$0xff]
  %v116 = vld [vmem:[%s2 + $0xb8] sm:$0xff]
  %v117 = vld [vmem:[%s2 + $0xc0] sm:$0xff]
  %v118 = vld [vmem:[%s2 + $0xc8] sm:$0xff]
  %v119 = vld [vmem:[%s2 + $0xd0] sm:$0xff]
  %v120 = vld [vmem:[%s2 + $0xd8] sm:$0xff]
  %v121 = vld [vmem:[%s2 + $0xe0] sm:$0xff]
  %v122 = vld [vmem:[%s2 + $0xe8] sm:$0xff]
  %v123 = vld [vmem:[%s2 + $0xf0] sm:$0xff]
  %v124 = vld [vmem:[%s2 + $0xf8] sm:$0xff]
  %v125 = vld [vmem:[%s2 + $0x100] sm:$0xff]
  %v126 = vld [vmem:[%s2 + $0x108] sm:$0xff]
  %v127 = vld [vmem:[%s2 + $0x110] sm:$0xff]
  %v128 = vld [vmem:[%s2 + $0x118] sm:$0xff]
  %v129 = vld [vmem:[%s2 + $0x120] sm:$0xff]
  %v130 = vld [vmem:[%s2 + $0x128] sm:$0xff]
  %v131 = vld [vmem:[%s2 + $0x130] sm:$0xff]
  %v132 = vld [vmem:[%s2 + $0x138] sm:$0xff]
  %v133 = vld [vmem:[%s2 + $0x140] sm:$0xff]
  %v134 = vld [vmem:[%s2 + $0x148] sm:$0xff]
  %v135 = vld [vmem:[%s2 + $0x150] sm:$0xff]
  %v136 = vld [vmem:[%s2 + $0x158] sm:$0xff]
  %v137 = vld [vmem:[%s2 + $0x160] sm:$0xff]
  %v138 = vld [vmem:[%s2 + $0x168] sm:$0xff]
  %v139 = vld [vmem:[%s2 + $0x170] sm:$0xff]
  %v140 = vld [vmem:[%s2 + $0x178] sm:$0xff]
  %v141 = vld [vmem:[%s2 + $0x180] sm:$0xff]
  %v142 = vld [vmem:[%s2 + $0x188] sm:$0xff]
  %v143 = vld [vmem:[%s2 + $0x190] sm:$0xff]
  %v144 = vld [vmem:[%s2 + $0x198] sm:$0xff]
  %v145 = vld [vmem:[%s2 + $0x1a0] sm:$0xff]
  %v146 = vld [vmem:[%s2 + $0x1a8] sm:$0xff]
  %v147 = vld [vmem:[%s2 + $0x1b0] sm:$0xff]
  %v148 = vld [vmem:[%s2 + $0x1b8] sm:$0xff]
  %v149 = vld [vmem:[%s2 + $0x1c0] sm:$0xff]
  %v150 = vld [vmem:[%s2 + $0x1c8] sm:$0xff]
  %v151 = vld [vmem:[%s2 + $0x1d0] sm:$0xff]
  %v152 = vld [vmem:[%s2 + $0x1d8] sm:$0xff]
  %v153 = vld [vmem:[%s2 + $0x1e0] sm:$0xff]
  %v154 = vld [vmem:[%s2 + $0x1e8] sm:$0xff]
  %v155 = vld [vmem:[%s2 + $0x1f0] sm:$0xff]
  %v156 = vld [vmem:[%s2 + $0x1f8] sm:$0xff]
  %158 = vset.pattern.permute.xlu0 0
  %159 = vperm.xlu0 %158, %v93
  %v160 = vpop.permute.xlu0 %159
  %163 = vset.pattern.permute.xlu0 0
  %164 = vperm.xlu0 %163, %v94
  %v165 = vpop.permute.xlu0 %164
  %168 = vset.pattern.permute.xlu0 0
  %169 = vperm.xlu0 %168, %v95
  %v170 = vpop.permute.xlu0 %169
  %173 = vset.pattern.permute.xlu0 0
  %174 = vperm.xlu0 %173, %v96
  %v175 = vpop.permute.xlu0 %174
  %178 = vset.pattern.permute.xlu0 0
  %179 = vperm.xlu0 %178, %v97
  %v180 = vpop.permute.xlu0 %179
  %183 = vset.pattern.permute.xlu0 0
  %184 = vperm.xlu0 %183, %v98
  %v185 = vpop.permute.xlu0 %184
  %188 = vset.pattern.permute.xlu0 0
  %189 = vperm.xlu0 %188, %v99
  %v190 = vpop.permute.xlu0 %189
  %193 = vset.pattern.permute.xlu0 0
  %194 = vperm.xlu0 %193, %v100
  %v195 = vpop.permute.xlu0 %194
  %198 = vset.pattern.permute.xlu0 0
  %199 = vperm.xlu0 %198, %v101
  %v200 = vpop.permute.xlu0 %199
  %203 = vset.pattern.permute.xlu0 0
  %204 = vperm.xlu0 %203, %v102
  %v205 = vpop.permute.xlu0 %204
  %208 = vset.pattern.permute.xlu0 0
  %209 = vperm.xlu0 %208, %v103
  %v210 = vpop.permute.xlu0 %209
  %213 = vset.pattern.permute.xlu0 0
  %214 = vperm.xlu0 %213, %v104
  %v215 = vpop.permute.xlu0 %214
  %218 = vset.pattern.permute.xlu0 0
  %219 = vperm.xlu0 %218, %v105
  %v220 = vpop.permute.xlu0 %219
  %223 = vset.pattern.permute.xlu0 0
  %224 = vperm.xlu0 %223, %v106
  %v225 = vpop.permute.xlu0 %224
  %228 = vset.pattern.permute.xlu0 0
  %229 = vperm.xlu0 %228, %v107
  %v230 = vpop.permute.xlu0 %229
  %233 = vset.pattern.permute.xlu0 0
  %234 = vperm.xlu0 %233, %v108
  %v235 = vpop.permute.xlu0 %234
  %238 = vset.pattern.permute.xlu0 0
  %239 = vperm.xlu0 %238, %v109
  %v240 = vpop.permute.xlu0 %239
  %243 = vset.pattern.permute.xlu0 0
  %244 = vperm.xlu0 %243, %v110
  %v245 = vpop.permute.xlu0 %244
  %248 = vset.pattern.permute.xlu0 0
  %249 = vperm.xlu0 %248, %v111
  %v250 = vpop.permute.xlu0 %249
  %253 = vset.pattern.permute.xlu0 0
  %254 = vperm.xlu0 %253, %v112
  %v255 = vpop.permute.xlu0 %254
  %258 = vset.pattern.permute.xlu0 0
  %259 = vperm.xlu0 %258, %v113
  %v260 = vpop.permute.xlu0 %259
  %263 = vset.pattern.permute.xlu0 0
  %264 = vperm.xlu0 %263, %v114
  %v265 = vpop.permute.xlu0 %264
  %268 = vset.pattern.permute.xlu0 0
  %269 = vperm.xlu0 %268, %v115
  %v270 = vpop.permute.xlu0 %269
  %273 = vset.pattern.permute.xlu0 0
  %274 = vperm.xlu0 %273, %v116
  %v275 = vpop.permute.xlu0 %274
  %278 = vset.pattern.permute.xlu0 0
  %279 = vperm.xlu0 %278, %v117
  %v280 = vpop.permute.xlu0 %279
  %283 = vset.pattern.permute.xlu0 0
  %284 = vperm.xlu0 %283, %v118
  %v285 = vpop.permute.xlu0 %284
  %288 = vset.pattern.permute.xlu0 0
  %289 = vperm.xlu0 %288, %v119
  %v290 = vpop.permute.xlu0 %289
  %293 = vset.pattern.permute.xlu0 0
  %294 = vperm.xlu0 %293, %v120
  %v295 = vpop.permute.xlu0 %294
  %298 = vset.pattern.permute.xlu0 0
  %299 = vperm.xlu0 %298, %v121
  %v300 = vpop.permute.xlu0 %299
  %303 = vset.pattern.permute.xlu0 0
  %304 = vperm.xlu0 %303, %v122
  %v305 = vpop.permute.xlu0 %304
  %308 = vset.pattern.permute.xlu0 0
  %309 = vperm.xlu0 %308, %v123
  %v310 = vpop.permute.xlu0 %309
  %313 = vset.pattern.permute.xlu0 0
  %314 = vperm.xlu0 %313, %v124
  %v315 = vpop.permute.xlu0 %314
  %318 = vset.pattern.permute.xlu0 0
  %319 = vperm.xlu0 %318, %v125
  %v320 = vpop.permute.xlu0 %319
  %323 = vset.pattern.permute.xlu0 0
  %324 = vperm.xlu0 %323, %v126
  %v325 = vpop.permute.xlu0 %324
  %328 = vset.pattern.permute.xlu0 0
  %329 = vperm.xlu0 %328, %v127
  %v330 = vpop.permute.xlu0 %329
  %333 = vset.pattern.permute.xlu0 0
  %334 = vperm.xlu0 %333, %v128
  %v335 = vpop.permute.xlu0 %334
  %338 = vset.pattern.permute.xlu0 0
  %339 = vperm.xlu0 %338, %v129
  %v340 = vpop.permute.xlu0 %339
  %343 = vset.pattern.permute.xlu0 0
  %344 = vperm.xlu0 %343, %v130
  %v345 = vpop.permute.xlu0 %344
  %348 = vset.pattern.permute.xlu0 0
  %349 = vperm.xlu0 %348, %v131
  %v350 = vpop.permute.xlu0 %349
  %353 = vset.pattern.permute.xlu0 0
  %354 = vperm.xlu0 %353, %v132
  %v355 = vpop.permute.xlu0 %354
  %358 = vset.pattern.permute.xlu0 0
  %359 = vperm.xlu0 %358, %v133
  %v360 = vpop.permute.xlu0 %359
  %363 = vset.pattern.permute.xlu0 0
  %364 = vperm.xlu0 %363, %v134
  %v365 = vpop.permute.xlu0 %364
  %368 = vset.pattern.permute.xlu0 0
  %369 = vperm.xlu0 %368, %v135
  %v370 = vpop.permute.xlu0 %369
  %373 = vset.pattern.permute.xlu0 0
  %374 = vperm.xlu0 %373, %v136
  %v375 = vpop.permute.xlu0 %374
  %378 = vset.pattern.permute.xlu0 0
  %379 = vperm.xlu0 %378, %v137
  %v380 = vpop.permute.xlu0 %379
  %383 = vset.pattern.permute.xlu0 0
  %384 = vperm.xlu0 %383, %v138
  %v385 = vpop.permute.xlu0 %384
  %388 = vset.pattern.permute.xlu0 0
  %389 = vperm.xlu0 %388, %v139
  %v390 = vpop.permute.xlu0 %389
  %393 = vset.pattern.permute.xlu0 0
  %394 = vperm.xlu0 %393, %v140
  %v395 = vpop.permute.xlu0 %394
  %398 = vset.pattern.permute.xlu0 0
  %399 = vperm.xlu0 %398, %v141
  %v400 = vpop.permute.xlu0 %399
  %403 = vset.pattern.permute.xlu0 0
  %404 = vperm.xlu0 %403, %v142
  %v405 = vpop.permute.xlu0 %404
  %408 = vset.pattern.permute.xlu0 0
  %409 = vperm.xlu0 %408, %v143
  %v410 = vpop.permute.xlu0 %409
  %413 = vset.pattern.permute.xlu0 0
  %414 = vperm.xlu0 %413, %v144
  %v415 = vpop.permute.xlu0 %414
  %418 = vset.pattern.permute.xlu0 0
  %419 = vperm.xlu0 %418, %v145
  %v420 = vpop.permute.xlu0 %419
  %423 = vset.pattern.permute.xlu0 0
  %424 = vperm.xlu0 %423, %v146
  %v425 = vpop.permute.xlu0 %424
  %428 = vset.pattern.permute.xlu0 0
  %429 = vperm.xlu0 %428, %v147
  %v430 = vpop.permute.xlu0 %429
  %433 = vset.pattern.permute.xlu0 0
  %434 = vperm.xlu0 %433, %v148
  %v435 = vpop.permute.xlu0 %434
  %438 = vset.pattern.permute.xlu0 0
  %439 = vperm.xlu0 %438, %v149
  %v440 = vpop.permute.xlu0 %439
  %443 = vset.pattern.permute.xlu0 0
  %444 = vperm.xlu0 %443, %v150
  %v445 = vpop.permute.xlu0 %444
  %448 = vset.pattern.permute.xlu0 0
  %449 = vperm.xlu0 %448, %v151
  %v450 = vpop.permute.xlu0 %449
  %453 = vset.pattern.permute.xlu0 0
  %454 = vperm.xlu0 %453, %v152
  %v455 = vpop.permute.xlu0 %454
  %458 = vset.pattern.permute.xlu0 0
  %459 = vperm.xlu0 %458, %v153
  %v460 = vpop.permute.xlu0 %459
  %463 = vset.pattern.permute.xlu0 0
  %464 = vperm.xlu0 %463, %v154
  %v465 = vpop.permute.xlu0 %464
  %468 = vset.pattern.permute.xlu0 0
  %469 = vperm.xlu0 %468, %v155
  %v470 = vpop.permute.xlu0 %469
  %473 = vset.pattern.permute.xlu0 0
  %474 = vperm.xlu0 %473, %v156
  %v475 = vpop.permute.xlu0 %474
  %v541 = vunpack.c.l.b16 %v21
  %v542 = vunpack.c.l.b16 %v22
  %v543 = vunpack.c.l.b16 %v23
  %v544 = vunpack.c.l.b16 %v24
  %v545 = vunpack.c.l.b16 %v25
  %v546 = vunpack.c.l.b16 %v26
  %v547 = vunpack.c.l.b16 %v27
  %v548 = vunpack.c.l.b16 %v28
  %v549 = vunpack.c.l.b16 %v29
  %v550 = vunpack.c.l.b16 %v30
  %v551 = vunpack.c.l.b16 %v31
  %v552 = vunpack.c.l.b16 %v32
  %v553 = vunpack.c.l.b16 %v33
  %v554 = vunpack.c.l.b16 %v34
  %v555 = vunpack.c.l.b16 %v35
  %v556 = vunpack.c.l.b16 %v36
  %v557 = vunpack.c.l.b16 %v37
  %v558 = vunpack.c.l.b16 %v38
  %v559 = vunpack.c.l.b16 %v39
  %v560 = vunpack.c.l.b16 %v40
  %v561 = vunpack.c.l.b16 %v41
  %v562 = vunpack.c.l.b16 %v42
  %v563 = vunpack.c.l.b16 %v43
  %v564 = vunpack.c.l.b16 %v44
  %v565 = vunpack.c.l.b16 %v45
  %v566 = vunpack.c.l.b16 %v46
  %v567 = vunpack.c.l.b16 %v47
  %v568 = vunpack.c.l.b16 %v48
  %v569 = vunpack.c.l.b16 %v49
  %v570 = vunpack.c.l.b16 %v50
  %v571 = vunpack.c.l.b16 %v51
  %v572 = vunpack.c.l.b16 %v52
  %v573 = vunpack.c.l.b16 %v53
  %v574 = vunpack.c.l.b16 %v54
  %v575 = vunpack.c.l.b16 %v55
  %v576 = vunpack.c.l.b16 %v56
  %v577 = vunpack.c.l.b16 %v57
  %v578 = vunpack.c.l.b16 %v58
  %v579 = vunpack.c.l.b16 %v59
  %v580 = vunpack.c.l.b16 %v60
  %v581 = vunpack.c.l.b16 %v61
  %v582 = vunpack.c.l.b16 %v62
  %v583 = vunpack.c.l.b16 %v63
  %v584 = vunpack.c.l.b16 %v64
  %v585 = vunpack.c.l.b16 %v65
  %v586 = vunpack.c.l.b16 %v66
  %v587 = vunpack.c.l.b16 %v67
  %v588 = vunpack.c.l.b16 %v68
  %v589 = vunpack.c.l.b16 %v69
  %v590 = vunpack.c.l.b16 %v70
  %v591 = vunpack.c.l.b16 %v71
  %v592 = vunpack.c.l.b16 %v72
  %v593 = vunpack.c.l.b16 %v73
  %v594 = vunpack.c.l.b16 %v74
  %v595 = vunpack.c.l.b16 %v75
  %v596 = vunpack.c.l.b16 %v76
  %v597 = vunpack.c.l.b16 %v77
  %v598 = vunpack.c.l.b16 %v78
  %v599 = vunpack.c.l.b16 %v79
  %v600 = vunpack.c.l.b16 %v80
  %v601 = vunpack.c.l.b16 %v81
  %v602 = vunpack.c.l.b16 %v82
  %v603 = vunpack.c.l.b16 %v83
  %v604 = vunpack.c.l.b16 %v84
  %v605 = vpack.c.b16 %v542, %v541
  %v606 = vpack.c.b16 %v544, %v543
  %v607 = vpack.c.b16 %v546, %v545
  %v608 = vpack.c.b16 %v548, %v547
  %v609 = vpack.c.b16 %v550, %v549
  %v610 = vpack.c.b16 %v552, %v551
  %v611 = vpack.c.b16 %v554, %v553
  %v612 = vpack.c.b16 %v556, %v555
  %v613 = vpack.c.b16 %v558, %v557
  %v614 = vpack.c.b16 %v560, %v559
  %v615 = vpack.c.b16 %v562, %v561
  %v616 = vpack.c.b16 %v564, %v563
  %v617 = vpack.c.b16 %v566, %v565
  %v618 = vpack.c.b16 %v568, %v567
  %v619 = vpack.c.b16 %v570, %v569
  %v620 = vpack.c.b16 %v572, %v571
  %v621 = vpack.c.b16 %v574, %v573
  %v622 = vpack.c.b16 %v576, %v575
  %v623 = vpack.c.b16 %v578, %v577
  %v624 = vpack.c.b16 %v580, %v579
  %v625 = vpack.c.b16 %v582, %v581
  %v626 = vpack.c.b16 %v584, %v583
  %v627 = vpack.c.b16 %v586, %v585
  %v628 = vpack.c.b16 %v588, %v587
  %v629 = vpack.c.b16 %v590, %v589
  %v630 = vpack.c.b16 %v592, %v591
  %v631 = vpack.c.b16 %v594, %v593
  %v632 = vpack.c.b16 %v596, %v595
  %v633 = vpack.c.b16 %v598, %v597
  %v634 = vpack.c.b16 %v600, %v599
  %v635 = vpack.c.b16 %v602, %v601
  %v636 = vpack.c.b16 %v604, %v603
  %v645 = vunpack.c.l.b16 %v85
  %v646 = vunpack.c.l.b16 %v86
  %v647 = vunpack.c.l.b16 %v87
  %v648 = vunpack.c.l.b16 %v88
  %v649 = vunpack.c.l.b16 %v89
  %v650 = vunpack.c.l.b16 %v90
  %v651 = vunpack.c.l.b16 %v91
  %v652 = vunpack.c.l.b16 %v92
  %v653 = vpack.c.b16 %v646, %v645
  %v654 = vpack.c.b16 %v648, %v647
  %v655 = vpack.c.b16 %v650, %v649
  %v656 = vpack.c.b16 %v652, %v651
  %vm661 = vcmask 523264
  %v663 = vsel %vm661, %v605, 0
  %v666 = vsel %vm661, %v606, 0
  %v669 = vsel %vm661, %v607, 0
  %v672 = vsel %vm661, %v608, 0
  %v675 = vsel %vm661, %v609, 0
  %v678 = vsel %vm661, %v610, 0
  %v681 = vsel %vm661, %v611, 0
  %v684 = vsel %vm661, %v612, 0
  %v687 = vsel %vm661, %v613, 0
  %v690 = vsel %vm661, %v614, 0
  %v693 = vsel %vm661, %v615, 0
  %v696 = vsel %vm661, %v616, 0
  %v699 = vsel %vm661, %v617, 0
  %v702 = vsel %vm661, %v618, 0
  %v705 = vsel %vm661, %v619, 0
  %v708 = vsel %vm661, %v620, 0
  %v711 = vsel %vm661, %v621, 0
  %v714 = vsel %vm661, %v622, 0
  %v717 = vsel %vm661, %v623, 0
  %v720 = vsel %vm661, %v624, 0
  %v723 = vsel %vm661, %v625, 0
  %v726 = vsel %vm661, %v626, 0
  %v729 = vsel %vm661, %v627, 0
  %v732 = vsel %vm661, %v628, 0
  %v735 = vsel %vm661, %v629, 0
  %v738 = vsel %vm661, %v630, 0
  %v741 = vsel %vm661, %v631, 0
  %v744 = vsel %vm661, %v632, 0
  %v747 = vsel %vm661, %v633, 0
  %v750 = vsel %vm661, %v634, 0
  %v753 = vsel %vm661, %v635, 0
  %v756 = vsel %vm661, %v636, 0
  %758 = vmatpush.bf16.msra.mxu0 0
  %759 = vmatpush.bf16.msra.mxu0 0
  %760 = vmatpush.bf16.msra.mxu0 0
  %761 = vmatpush.bf16.msra.mxu0 0
  %762 = vmatpush.bf16.msra.mxu0 %v656
  %763 = vmatpush.bf16.msra.mxu0 %v655
  %764 = vmatpush.bf16.msra.mxu0 %v654
  %765 = vmatpush.bf16.msra.mxu0 %v653
  %766 = vmatmul.bf16.gmra.mxu0 %v663
  %v767 = vpop.f32.mrf.mxu0
  %v768 = vadd.f32 %v160, %v767
  %v769 = vpop.f32.mrf.mxu0
  %v770 = vadd.f32 %v165, %v769
  %771 = vmatmul.bf16.gmra.mxu0 %v666
  %v772 = vpop.f32.mrf.mxu0
  %v773 = vadd.f32 %v170, %v772
  %v774 = vpop.f32.mrf.mxu0
  %v775 = vadd.f32 %v175, %v774
  %776 = vmatmul.bf16.gmra.mxu0 %v669
  %v777 = vpop.f32.mrf.mxu0
  %v778 = vadd.f32 %v180, %v777
  %v779 = vpop.f32.mrf.mxu0
  %v780 = vadd.f32 %v185, %v779
  %781 = vmatmul.bf16.gmra.mxu0 %v672
  %v782 = vpop.f32.mrf.mxu0
  %v783 = vadd.f32 %v190, %v782
  %v784 = vpop.f32.mrf.mxu0
  %v785 = vadd.f32 %v195, %v784
  %786 = vmatmul.bf16.gmra.mxu0 %v675
  %v787 = vpop.f32.mrf.mxu0
  %v788 = vadd.f32 %v200, %v787
  %v789 = vpop.f32.mrf.mxu0
  %v790 = vadd.f32 %v205, %v789
  %791 = vmatmul.bf16.gmra.mxu0 %v678
  %v792 = vpop.f32.mrf.mxu0
  %v793 = vadd.f32 %v210, %v792
  %v794 = vpop.f32.mrf.mxu0
  %v795 = vadd.f32 %v215, %v794
  %796 = vmatmul.bf16.gmra.mxu0 %v681
  %v797 = vpop.f32.mrf.mxu0
  %v798 = vadd.f32 %v220, %v797
  %v799 = vpop.f32.mrf.mxu0
  %v800 = vadd.f32 %v225, %v799
  %801 = vmatmul.bf16.gmra.mxu0 %v684
  %v802 = vpop.f32.mrf.mxu0
  %v803 = vadd.f32 %v230, %v802
  %v804 = vpop.f32.mrf.mxu0
  %v805 = vadd.f32 %v235, %v804
  %806 = vmatmul.bf16.gmra.mxu0 %v687
  %v807 = vpop.f32.mrf.mxu0
  %v808 = vadd.f32 %v240, %v807
  %v809 = vpop.f32.mrf.mxu0
  %v810 = vadd.f32 %v245, %v809
  %811 = vmatmul.bf16.gmra.mxu0 %v690
  %v812 = vpop.f32.mrf.mxu0
  %v813 = vadd.f32 %v250, %v812
  %v814 = vpop.f32.mrf.mxu0
  %v815 = vadd.f32 %v255, %v814
  %816 = vmatmul.bf16.gmra.mxu0 %v693
  %v817 = vpop.f32.mrf.mxu0
  %v818 = vadd.f32 %v260, %v817
  %v819 = vpop.f32.mrf.mxu0
  %v820 = vadd.f32 %v265, %v819
  %821 = vmatmul.bf16.gmra.mxu0 %v696
  %v822 = vpop.f32.mrf.mxu0
  %v823 = vadd.f32 %v270, %v822
  %v824 = vpop.f32.mrf.mxu0
  %v825 = vadd.f32 %v275, %v824
  %826 = vmatmul.bf16.gmra.mxu0 %v699
  %v827 = vpop.f32.mrf.mxu0
  %v828 = vadd.f32 %v280, %v827
  %v829 = vpop.f32.mrf.mxu0
  %v830 = vadd.f32 %v285, %v829
  %831 = vmatmul.bf16.gmra.mxu0 %v702
  %v832 = vpop.f32.mrf.mxu0
  %v833 = vadd.f32 %v290, %v832
  %v834 = vpop.f32.mrf.mxu0
  %v835 = vadd.f32 %v295, %v834
  %836 = vmatmul.bf16.gmra.mxu0 %v705
  %v837 = vpop.f32.mrf.mxu0
  %v838 = vadd.f32 %v300, %v837
  %v839 = vpop.f32.mrf.mxu0
  %v840 = vadd.f32 %v305, %v839
  %841 = vmatmul.bf16.gmra.mxu0 %v708
  %v842 = vpop.f32.mrf.mxu0
  %v843 = vadd.f32 %v310, %v842
  %v844 = vpop.f32.mrf.mxu0
  %v845 = vadd.f32 %v315, %v844
  %846 = vmatmul.bf16.gmra.mxu0 %v711
  %v847 = vpop.f32.mrf.mxu0
  %v848 = vadd.f32 %v320, %v847
  %v849 = vpop.f32.mrf.mxu0
  %v850 = vadd.f32 %v325, %v849
  %851 = vmatmul.bf16.gmra.mxu0 %v714
  %v852 = vpop.f32.mrf.mxu0
  %v853 = vadd.f32 %v330, %v852
  %v854 = vpop.f32.mrf.mxu0
  %v855 = vadd.f32 %v335, %v854
  %856 = vmatmul.bf16.gmra.mxu0 %v717
  %v857 = vpop.f32.mrf.mxu0
  %v858 = vadd.f32 %v340, %v857
  %v859 = vpop.f32.mrf.mxu0
  %v860 = vadd.f32 %v345, %v859
  %861 = vmatmul.bf16.gmra.mxu0 %v720
  %v862 = vpop.f32.mrf.mxu0
  %v863 = vadd.f32 %v350, %v862
  %v864 = vpop.f32.mrf.mxu0
  %v865 = vadd.f32 %v355, %v864
  %866 = vmatmul.bf16.gmra.mxu0 %v723
  %v867 = vpop.f32.mrf.mxu0
  %v868 = vadd.f32 %v360, %v867
  %v869 = vpop.f32.mrf.mxu0
  %v870 = vadd.f32 %v365, %v869
  %871 = vmatmul.bf16.gmra.mxu0 %v726
  %v872 = vpop.f32.mrf.mxu0
  %v873 = vadd.f32 %v370, %v872
  %v874 = vpop.f32.mrf.mxu0
  %v875 = vadd.f32 %v375, %v874
  %876 = vmatmul.bf16.gmra.mxu0 %v729
  %v877 = vpop.f32.mrf.mxu0
  %v878 = vadd.f32 %v380, %v877
  %v879 = vpop.f32.mrf.mxu0
  %v880 = vadd.f32 %v385, %v879
  %881 = vmatmul.bf16.gmra.mxu0 %v732
  %v882 = vpop.f32.mrf.mxu0
  %v883 = vadd.f32 %v390, %v882
  %v884 = vpop.f32.mrf.mxu0
  %v885 = vadd.f32 %v395, %v884
  %886 = vmatmul.bf16.gmra.mxu0 %v735
  %v887 = vpop.f32.mrf.mxu0
  %v888 = vadd.f32 %v400, %v887
  %v889 = vpop.f32.mrf.mxu0
  %v890 = vadd.f32 %v405, %v889
  %891 = vmatmul.bf16.gmra.mxu0 %v738
  %v892 = vpop.f32.mrf.mxu0
  %v893 = vadd.f32 %v410, %v892
  %v894 = vpop.f32.mrf.mxu0
  %v895 = vadd.f32 %v415, %v894
  %896 = vmatmul.bf16.gmra.mxu0 %v741
  %v897 = vpop.f32.mrf.mxu0
  %v898 = vadd.f32 %v420, %v897
  %v899 = vpop.f32.mrf.mxu0
  %v900 = vadd.f32 %v425, %v899
  %901 = vmatmul.bf16.gmra.mxu0 %v744
  %v902 = vpop.f32.mrf.mxu0
  %v903 = vadd.f32 %v430, %v902
  %v904 = vpop.f32.mrf.mxu0
  %v905 = vadd.f32 %v435, %v904
  %906 = vmatmul.bf16.gmra.mxu0 %v747
  %v907 = vpop.f32.mrf.mxu0
  %v908 = vadd.f32 %v440, %v907
  %v909 = vpop.f32.mrf.mxu0
  %v910 = vadd.f32 %v445, %v909
  %911 = vmatmul.bf16.gmra.mxu0 %v750
  %v912 = vpop.f32.mrf.mxu0
  %v913 = vadd.f32 %v450, %v912
  %v914 = vpop.f32.mrf.mxu0
  %v915 = vadd.f32 %v455, %v914
  %916 = vmatmul.bf16.gmra.mxu0 %v753
  %v917 = vpop.f32.mrf.mxu0
  %v918 = vadd.f32 %v460, %v917
  %v919 = vpop.f32.mrf.mxu0
  %v920 = vadd.f32 %v465, %v919
  %921 = vmatmul.bf16.gmra.mxu0 %v756
  %v922 = vpop.f32.mrf.mxu0
  %v923 = vadd.f32 %v470, %v922
  %v924 = vpop.f32.mrf.mxu0
  %v925 = vadd.f32 %v475, %v924
  %926 = vdwg.mxu0
  %v927 = vmax.f32 %v768, 0.0
  %v928 = vmax.f32 %v770, 0.0
  %v929 = vmax.f32 %v773, 0.0
  %v930 = vmax.f32 %v775, 0.0
  %v931 = vmax.f32 %v778, 0.0
  %v932 = vmax.f32 %v780, 0.0
  %v933 = vmax.f32 %v783, 0.0
  %v934 = vmax.f32 %v785, 0.0
  %v935 = vmax.f32 %v788, 0.0
  %v936 = vmax.f32 %v790, 0.0
  %v937 = vmax.f32 %v793, 0.0
  %v938 = vmax.f32 %v795, 0.0
  %v939 = vmax.f32 %v798, 0.0
  %v940 = vmax.f32 %v800, 0.0
  %v941 = vmax.f32 %v803, 0.0
  %v942 = vmax.f32 %v805, 0.0
  %v943 = vmax.f32 %v808, 0.0
  %v944 = vmax.f32 %v810, 0.0
  %v945 = vmax.f32 %v813, 0.0
  %v946 = vmax.f32 %v815, 0.0
  %v947 = vmax.f32 %v818, 0.0
  %v948 = vmax.f32 %v820, 0.0
  %v949 = vmax.f32 %v823, 0.0
  %v950 = vmax.f32 %v825, 0.0
  %v951 = vmax.f32 %v828, 0.0
  %v952 = vmax.f32 %v830, 0.0
  %v953 = vmax.f32 %v833, 0.0
  %v954 = vmax.f32 %v835, 0.0
  %v955 = vmax.f32 %v838, 0.0
  %v956 = vmax.f32 %v840, 0.0
  %v957 = vmax.f32 %v843, 0.0
  %v958 = vmax.f32 %v845, 0.0
  %v959 = vmax.f32 %v848, 0.0
  %v960 = vmax.f32 %v850, 0.0
  %v961 = vmax.f32 %v853, 0.0
  %v962 = vmax.f32 %v855, 0.0
  %v963 = vmax.f32 %v858, 0.0
  %v964 = vmax.f32 %v860, 0.0
  %v965 = vmax.f32 %v863, 0.0
  %v966 = vmax.f32 %v865, 0.0
  %v967 = vmax.f32 %v868, 0.0
  %v968 = vmax.f32 %v870, 0.0
  %v969 = vmax.f32 %v873, 0.0
  %v970 = vmax.f32 %v875, 0.0
  %v971 = vmax.f32 %v878, 0.0
  %v972 = vmax.f32 %v880, 0.0
  %v973 = vmax.f32 %v883, 0.0
  %v974 = vmax.f32 %v885, 0.0
  %v975 = vmax.f32 %v888, 0.0
  %v976 = vmax.f32 %v890, 0.0
  %v977 = vmax.f32 %v893, 0.0
  %v978 = vmax.f32 %v895, 0.0
  %v979 = vmax.f32 %v898, 0.0
  %v980 = vmax.f32 %v900, 0.0
  %v981 = vmax.f32 %v903, 0.0
  %v982 = vmax.f32 %v905, 0.0
  %v983 = vmax.f32 %v908, 0.0
  %v984 = vmax.f32 %v910, 0.0
  %v985 = vmax.f32 %v913, 0.0
  %v986 = vmax.f32 %v915, 0.0
  %v987 = vmax.f32 %v918, 0.0
  %v988 = vmax.f32 %v920, 0.0
  %v989 = vmax.f32 %v923, 0.0
  %v990 = vmax.f32 %v925, 0.0
  %v991 = vpack.c.bf16 %v928, %v927
  %v992 = vpack.c.bf16 %v930, %v929
  %v993 = vpack.c.bf16 %v932, %v931
  %v994 = vpack.c.bf16 %v934, %v933
  %v995 = vpack.c.bf16 %v936, %v935
  %v996 = vpack.c.bf16 %v938, %v937
  %v997 = vpack.c.bf16 %v940, %v939
  %v998 = vpack.c.bf16 %v942, %v941
  %v999 = vpack.c.bf16 %v944, %v943
  %v1000 = vpack.c.bf16 %v946, %v945
  %v1001 = vpack.c.bf16 %v948, %v947
  %v1002 = vpack.c.bf16 %v950, %v949
  %v1003 = vpack.c.bf16 %v952, %v951
  %v1004 = vpack.c.bf16 %v954, %v953
  %v1005 = vpack.c.bf16 %v956, %v955
  %v1006 = vpack.c.bf16 %v958, %v957
  %v1007 = vpack.c.bf16 %v960, %v959
  %v1008 = vpack.c.bf16 %v962, %v961
  %v1009 = vpack.c.bf16 %v964, %v963
  %v1010 = vpack.c.bf16 %v966, %v965
  %v1011 = vpack.c.bf16 %v968, %v967
  %v1012 = vpack.c.bf16 %v970, %v969
  %v1013 = vpack.c.bf16 %v972, %v971
  %v1014 = vpack.c.bf16 %v974, %v973
  %v1015 = vpack.c.bf16 %v976, %v975
  %v1016 = vpack.c.bf16 %v978, %v977
  %v1017 = vpack.c.bf16 %v980, %v979
  %v1018 = vpack.c.bf16 %v982, %v981
  %v1019 = vpack.c.bf16 %v984, %v983
  %v1020 = vpack.c.bf16 %v986, %v985
  %v1021 = vpack.c.bf16 %v988, %v987
  %v1022 = vpack.c.bf16 %v990, %v989
  %v1023 = vld [vmem:[%s3] sm:$0x77]
  %v1024 = vld [vmem:[%s3 + $0x8] sm:$0x77]
  %v1025 = vld [vmem:[%s4] sm:$0x3f]
  %1027 = vset.pattern.permute.xlu0 0
  %1028 = vperm.xlu0 %1027, %v1025
  %v1029 = vpop.permute.xlu0 %1028
  %v1033 = vunpack.c.l.b16 %v1023
  %v1034 = vunpack.c.h.b16 %v1023
  %v1035 = vunpack.c.l.b16 %v1024
  %v1036 = vunpack.c.h.b16 %v1024
  %v1037 = vpack.c.b16 %v1033, %v1033
  %v1038 = vpack.c.b16 %v1034, %v1034
  %v1039 = vpack.c.b16 %v1035, %v1035
  %v1040 = vpack.c.b16 %v1036, %v1036
  %1045 = vmatpush.bf16.msra.mxu0 %v998
  %1046 = vmatpush.bf16.msra.mxu0 %v997
  %1047 = vmatpush.bf16.msra.mxu0 %v996
  %1048 = vmatpush.bf16.msra.mxu0 %v995
  %1049 = vmatpush.bf16.msra.mxu0 %v994
  %1050 = vmatpush.bf16.msra.mxu0 %v993
  %1051 = vmatpush.bf16.msra.mxu0 %v992
  %1052 = vmatpush.bf16.msra.mxu0 %v991
  %1053 = vmatmul.bf16.gmra.mxu0 %v1037
  %v1054 = vpop.f32.mrf.mxu0
  %v1055 = vadd.f32 %v1029, %v1054
  %v1056 = vpop.f32.mrf.mxu0
  %1057 = vdwg.mxu0
  %1058 = vmatpush.bf16.msra.mxu0 %v1006
  %1059 = vmatpush.bf16.msra.mxu0 %v1005
  %1060 = vmatpush.bf16.msra.mxu0 %v1004
  %1061 = vmatpush.bf16.msra.mxu0 %v1003
  %1062 = vmatpush.bf16.msra.mxu0 %v1002
  %1063 = vmatpush.bf16.msra.mxu0 %v1001
  %1064 = vmatpush.bf16.msra.mxu0 %v1000
  %1065 = vmatpush.bf16.msra.mxu0 %v999
  %1066 = vmatmul.bf16.gmra.mxu0 %v1038
  %v1067 = vpop.f32.mrf.mxu0
  %v1068 = vadd.f32 %v1055, %v1067
  %v1069 = vpop.f32.mrf.mxu0
  %1070 = vdwg.mxu0
  %1071 = vmatpush.bf16.msra.mxu0 %v1014
  %1072 = vmatpush.bf16.msra.mxu0 %v1013
  %1073 = vmatpush.bf16.msra.mxu0 %v1012
  %1074 = vmatpush.bf16.msra.mxu0 %v1011
  %1075 = vmatpush.bf16.msra.mxu0 %v1010
  %1076 = vmatpush.bf16.msra.mxu0 %v1009
  %1077 = vmatpush.bf16.msra.mxu0 %v1008
  %1078 = vmatpush.bf16.msra.mxu0 %v1007
  %1079 = vmatmul.bf16.gmra.mxu0 %v1039
  %v1080 = vpop.f32.mrf.mxu0
  %v1081 = vadd.f32 %v1068, %v1080
  %v1082 = vpop.f32.mrf.mxu0
  %1083 = vdwg.mxu0
  %1084 = vmatpush.bf16.msra.mxu0 %v1022
  %1085 = vmatpush.bf16.msra.mxu0 %v1021
  %1086 = vmatpush.bf16.msra.mxu0 %v1020
  %1087 = vmatpush.bf16.msra.mxu0 %v1019
  %1088 = vmatpush.bf16.msra.mxu0 %v1018
  %1089 = vmatpush.bf16.msra.mxu0 %v1017
  %1090 = vmatpush.bf16.msra.mxu0 %v1016
  %1091 = vmatpush.bf16.msra.mxu0 %v1015
  %1092 = vmatmul.bf16.gmra.mxu0 %v1040
  %v1093 = vpop.f32.mrf.mxu0
  %v1094 = vadd.f32 %v1081, %v1093
  %v1095 = vpop.f32.mrf.mxu0
  %1096 = vdwg.mxu0
  %1097 = vst [vmem:[%s5] sm:$0x3f] %v1094
  // Predicated region
  $region22: #{actor_forward.7} parent=0 // pred_check
    _
  $region23: #{actor_forward.7} parent=0 // pred_check_branch
    %1099 = sbr.rel (0) target = $region25
  $region24: #{actor_forward.7} parent=0 // pred_region
    _
  $region25: #{actor_forward.7} parent=0 // pred_fallthru
    _
  // Predicated region
  $region26: #{actor_forward.7} parent=0 // pred_check
    _
  $region27: #{actor_forward.7} parent=0 // pred_check_branch
    %1101 = sbr.rel (0) target = $region29
  $region28: #{actor_forward.7} parent=0 // pred_region
    _
  $region29: #{actor_forward.7} parent=0 // pred_fallthru
    _

</llo_original>
